<compile_context>
chip_gen: v5e
topology: v5e:2x2
jax: 0.10.0
libtpu: 0.0.40
codegen_flags: <defaults>
</compile_context>

<pallas_src>
import functools

import jax
import jax.numpy as jnp
import numpy as np
from jax.experimental import pallas as pl
from jax.experimental.pallas import tpu as pltpu


def _layer_norm(x, g, b, eps=1e-5):
    mu = jnp.mean(x, axis=-1, keepdims=True)
    var = jnp.mean((x - mu) ** 2, axis=-1, keepdims=True)
    return (x - mu) * jax.lax.rsqrt(var + eps) * g + b


# ---------------------------------------------------------------------------
# Kernel 1: pre-LN self-attention block  (LN1 -> MHA -> out-proj -> + residual)
# ---------------------------------------------------------------------------
def _attn_block_kernel(TQ, dh, num_heads, cdt, approx,
                       hs_ref, kmask_ref,
                       ln1_g_ref, ln1_b_ref,
                       wq_ref, bq_ref, wk_ref, wv_ref, bv_ref, wo_ref, bo_ref,
                       out_ref,
                       k_scr, v_scr, q_scr, ctx_scr):
    H = num_heads
    scale = dh ** -0.5
    qi = pl.program_id(1)
    hs_b = hs_ref.at[0]                                   # (S_pad, D) view

    # K/V for the full (padded) sequence: one full-width matmul pair per batch
    # element, stored as (S_pad, D) so per-head access is a static lane slice.
    @pl.when(qi == 0)
    def _():
        xn_full = _layer_norm(hs_b[...].astype(jnp.float32),
                              ln1_g_ref[...], ln1_b_ref[...]).astype(cdt)
        k_scr[...] = jnp.dot(xn_full, wk_ref[...],
                             preferred_element_type=jnp.float32).astype(cdt)
        # layer_head_mask already folded into wv/bv in the wrapper.
        v_scr[...] = (jnp.dot(xn_full, wv_ref[...],
                              preferred_element_type=jnp.float32)
                      + bv_ref[...]).astype(cdt)

    q_start = pl.multiple_of(qi * TQ, TQ)
    x_tile = hs_b[pl.ds(q_start, TQ), :].astype(jnp.float32)      # (TQ, D) residual
    xn = _layer_norm(x_tile, ln1_g_ref[...], ln1_b_ref[...]).astype(cdt)
    # Full-width Q projection (TQ, D) @ (D, D).
    q_scr[...] = ((jnp.dot(xn, wq_ref[...], preferred_element_type=jnp.float32)
                   + bq_ref[...]) * scale).astype(cdt)
    mask_add = kmask_ref[0]                                       # (1, S_pad) additive

    # Per-head score / softmax / PV, statically unrolled with static lane slices.
    for h in range(H):
        lo = h * dh
        q_h = q_scr[:, lo:lo + dh]                                # (TQ, dh)
        k_h = k_scr[:, lo:lo + dh]                                # (S_pad, dh)
        s = jax.lax.dot_general(q_h, k_h, (((1,), (1,)), ((), ())),
                                preferred_element_type=jnp.float32) + mask_add
        s = s - jnp.max(s, axis=-1, keepdims=True)
        e = jnp.exp(s)
        p = e * pl.reciprocal(jnp.sum(e, axis=-1, keepdims=True), approx=approx)
        ctx_scr[:, lo:lo + dh] = jnp.dot(
            p.astype(cdt), v_scr[:, lo:lo + dh],
            preferred_element_type=jnp.float32).astype(cdt)

    # Single full-width out-projection (TQ, D) @ (D, D).
    attn = jnp.dot(ctx_scr[...], wo_ref[...], preferred_element_type=jnp.float32)
    out_ref[0] = (x_tile + attn + bo_ref[...]).astype(out_ref.dtype)


# ---------------------------------------------------------------------------
# Kernel 2: pre-LN FFN block  (LN2 -> fc1 -> GELU -> fc2 -> + residual),
# tiled over the ffn dimension F with a VMEM accumulator; LN cached at fi == 0.
# ---------------------------------------------------------------------------
def _ffn_block_kernel(cdt, gelu_approx, hs_ref, ln2_g_ref, ln2_b_ref,
                      w1_ref, b1_ref, w2_ref, b2_ref,
                      out_ref, acc_scr, hn_scr):
    fi = pl.program_id(2)

    @pl.when(fi == 0)
    def _():
        x = hs_ref[0].astype(jnp.float32)                         # (TS, D) residual
        hn_scr[...] = _layer_norm(x, ln2_g_ref[...], ln2_b_ref[...]).astype(cdt)
        acc_scr[...] = x + b2_ref[...]                            # residual + fc2 bias once

    h1 = (jnp.dot(hn_scr[...], w1_ref[...], preferred_element_type=jnp.float32)
          + b1_ref[...])
    h1 = jax.nn.gelu(h1, approximate=gelu_approx)                 # torch nn.GELU == exact erf
    acc_scr[...] += jnp.dot(h1.astype(cdt), w2_ref[...],
                            preferred_element_type=jnp.float32)

    @pl.when(fi == pl.num_programs(2) - 1)
    def _():
        out_ref[0] = acc_scr[...].astype(out_ref.dtype)


# ---------------------------------------------------------------------------
# Wrapper
# ---------------------------------------------------------------------------
def _round_up(x, m):
    return (x + m - 1) // m * m


def _pick_tile(total, target, align):
    """Largest t <= target with t % align == 0 and total % t == 0, else total."""
    if total <= target:
        return total
    t = (min(target, total) // align) * align
    while t >= align:
        if total % t == 0:
            return t
        t -= align
    return total


def whisper_encoder_layer(hidden_states, attention_mask, layer_head_mask, params,
                          num_heads, *, compute_dtype=jnp.bfloat16,
                          approx_softmax=True, gelu_approximate=False,
                          q_tile=256, s_tile=512, f_tile=512,
                          vmem_limit_bytes=48 * 1024 * 1024):
    B, S, D = hidden_states.shape
    H = num_heads
    assert D % H == 0
    dh = D // H
    F = params["w1"].shape[1]
    cdt = compute_dtype
    f32 = jnp.float32

    # ---- tiles + sequence padding so tiles always respect the (8, 128) rule ----
    TQ = _round_up(min(q_tile, _round_up(S, 8)), 8)
    S_pad = _round_up(S, TQ)
    TS = _pick_tile(S_pad, s_tile, 8)
    TF = _pick_tile(F, f_tile, 128)

    hs = hidden_states
    if S_pad != S:
        hs = jnp.pad(hs, ((0, 0), (0, S_pad - S), (0, 0)))

    NEG = jnp.float32(-1e9)
    if attention_mask is None:
        key_mask = jnp.zeros((B, 1, S), f32)
    elif attention_mask.ndim == 4:
        # encoder attention_mask is a key-padding mask broadcast over query rows.
        key_mask = attention_mask[:, 0, 0, :].reshape(B, 1, S).astype(f32)
    else:
        key_mask = attention_mask.reshape(B, 1, S).astype(f32)
    if S_pad != S:
        key_mask = jnp.pad(key_mask, ((0, 0), (0, 0), (0, S_pad - S)),
                           constant_values=NEG)

    if layer_head_mask is None:
        hm = jnp.ones((H,), f32)
    else:
        hm = layer_head_mask.reshape(H).astype(f32)

    # --- layout plumbing: head mask folded into V projection, 2-D biases/LN params ---
    wv_scaled = (params["wv"].reshape(D, H, dh) * hm[None, :, None]).reshape(D, D)
    bv_scaled = (params["bv"].reshape(H, dh) * hm[:, None]).reshape(D)

    wq = params["wq"].astype(cdt)
    wk = params["wk"].astype(cdt)
    wv = wv_scaled.astype(cdt)
    wo = params["wo"].astype(cdt)
    bq = params["bq"].reshape(1, D).astype(f32)
    bv = bv_scaled.reshape(1, D).astype(f32)
    bo = params["bo"].reshape(1, D).astype(f32)
    ln1_g = params["ln1_g"].reshape(1, D).astype(f32)
    ln1_b = params["ln1_b"].reshape(1, D).astype(f32)
    ln2_g = params["ln2_g"].reshape(1, D).astype(f32)
    ln2_b = params["ln2_b"].reshape(1, D).astype(f32)
    w1 = params["w1"].astype(cdt)
    b1 = params["b1"].reshape(1, F).astype(f32)
    w2 = params["w2"].astype(cdt)
    b2 = params["b2"].reshape(1, D).astype(f32)

    def whole(arr):
        nd = arr.ndim
        return pl.BlockSpec(arr.shape, lambda *_, _nd=nd: (0,) * _nd)

    # ------------------- attention block -------------------
    attn_kernel = functools.partial(_attn_block_kernel, TQ, dh, H, cdt, approx_softmax)
    attn_out = pl.pallas_call(
        attn_kernel,
        out_shape=jax.ShapeDtypeStruct((B, S_pad, D), hidden_states.dtype),
        grid=(B, S_pad // TQ),
        in_specs=[
            pl.BlockSpec((1, S_pad, D), lambda b, q: (b, 0, 0)),   # full seq (K/V + q-tile source)
            pl.BlockSpec((1, 1, S_pad), lambda b, q: (b, 0, 0)),   # additive key mask
            whole(ln1_g), whole(ln1_b),
            whole(wq), whole(bq), whole(wk), whole(wv), whole(bv),
            whole(wo), whole(bo),
        ],
        out_specs=pl.BlockSpec((1, TQ, D), lambda b, q: (b, q, 0)),
        scratch_shapes=[
            pltpu.VMEM((S_pad, D), cdt),          # K
            pltpu.VMEM((S_pad, D), cdt),          # V (head mask folded in)
            pltpu.VMEM((TQ, D), cdt),             # Q for this tile
            pltpu.VMEM((TQ, D), cdt),             # per-head contexts -> one out-proj matmul
        ],
        compiler_params=pltpu.CompilerParams(
            dimension_semantics=("parallel", "arbitrary"),
            vmem_limit_bytes=vmem_limit_bytes),
    )(hs, key_mask, ln1_g, ln1_b, wq, bq, wk, wv, bv, wo, bo)

    # ------------------- FFN block -------------------
    ffn_kernel = functools.partial(_ffn_block_kernel, cdt, gelu_approximate)
    out = pl.pallas_call(
        ffn_kernel,
        out_shape=jax.ShapeDtypeStruct((B, S_pad, D), hidden_states.dtype),
        grid=(B, S_pad // TS, F // TF),
        in_specs=[
            pl.BlockSpec((1, TS, D), lambda b, s, f: (b, s, 0)),
            whole(ln2_g), whole(ln2_b),
            pl.BlockSpec((D, TF), lambda b, s, f: (0, f)),         # fc1 weight F-tile
            pl.BlockSpec((1, TF), lambda b, s, f: (0, f)),         # fc1 bias F-tile
            pl.BlockSpec((TF, D), lambda b, s, f: (f, 0)),         # fc2 weight F-tile
            whole(b2),
        ],
        out_specs=pl.BlockSpec((1, TS, D), lambda b, s, f: (b, s, 0)),
        scratch_shapes=[pltpu.VMEM((TS, D), jnp.float32),          # fc2 accumulator
                        pltpu.VMEM((TS, D), cdt)],                 # cached LayerNorm(x)
        compiler_params=pltpu.CompilerParams(
            dimension_semantics=("parallel", "parallel", "arbitrary"),
            vmem_limit_bytes=vmem_limit_bytes),
    )(attn_out, ln2_g, ln2_b, w1, b1, w2, b2)

    if S_pad != S:
        out = out[:, :S, :]
    return out


# ---------------------------------------------------------------------------
# Pure-JAX reference (mirrors the PyTorch forward) for correctness checking
# ---------------------------------------------------------------------------
def reference_layer(hs, mask, head_mask, p, num_heads):
    B, S, D = hs.shape
    H = num_heads
    dh = D // H
    scale = dh ** -0.5

    def ln(x, g, b):
        mu = x.mean(-1, keepdims=True)
        var = ((x - mu) ** 2).mean(-1, keepdims=True)
        return (x - mu) / jnp.sqrt(var + 1e-5) * g + b

    residual = hs
    xn = ln(hs, p["ln1_g"], p["ln1_b"])
    q = (xn @ p["wq"] + p["bq"]) * scale
    k = xn @ p["wk"]
    v = xn @ p["wv"] + p["bv"]
    q = q.reshape(B, S, H, dh).transpose(0, 2, 1, 3)
    k = k.reshape(B, S, H, dh).transpose(0, 2, 1, 3)
    v = v.reshape(B, S, H, dh).transpose(0, 2, 1, 3)
    s = jnp.einsum("bhqd,bhkd->bhqk", q, k) + mask
    pr = jax.nn.softmax(s, axis=-1) * head_mask[None, :, None, None]
    ctx = jnp.einsum("bhqk,bhkd->bhqd", pr, v).transpose(0, 2, 1, 3).reshape(B, S, D)
    hs = residual + (ctx @ p["wo"] + p["bo"])
    residual2 = hs
    hn = ln(hs, p["ln2_g"], p["ln2_b"])
    h1 = jax.nn.gelu(hn @ p["w1"] + p["b1"], approximate=False)
    return residual2 + (h1 @ p["w2"] + p["b2"])


def _make_case(seed, B, S, D, H, F):
    key = jax.random.PRNGKey(seed)
    ks = jax.random.split(key, 16)

    def w(k, shape):
        return (0.02 * jax.random.normal(k, shape)).astype(jnp.float32)

    params = {
        "ln1_g": jnp.ones((D,), jnp.float32),
        "ln1_b": jnp.zeros((D,), jnp.float32),
        "wq": w(ks[0], (D, D)), "bq": w(ks[1], (D,)),
        "wk": w(ks[2], (D, D)),                      # k_proj: bias=False
        "wv": w(ks[3], (D, D)), "bv": w(ks[4], (D,)),
        "wo": w(ks[5], (D, D)), "bo": w(ks[6], (D,)),
        "ln2_g": jnp.ones((D,), jnp.float32),
        "ln2_b": jnp.zeros((D,), jnp.float32),
        "w1": w(ks[7], (D, F)), "b1": w(ks[8], (F,)),
        "w2": w(ks[9], (F, D)), "b2": w(ks[10], (D,)),
    }
    hidden_states = jax.random.normal(ks[11], (B, S, D), jnp.float32)

    # additive attention mask: mask out last 2 source positions of batch 1
    attn_mask = jnp.zeros((B, 1, S, S), jnp.float32)
    attn_mask = attn_mask.at[1, 0, :, -2:].set(-1e9)

    # per-head mask exercising the layer_head_mask path (folded into V in wrapper)
    layer_head_mask = jnp.where(jnp.arange(H) % 4 == 3, 0.0,
                                jnp.where(jnp.arange(H) % 4 == 1, 0.5, 1.0)
                                ).astype(jnp.float32)
    return hidden_states, attn_mask, layer_head_mask, params


# ---------------------------------------------------------------------------
if __name__ == "__main__":
    B, D, H, F = 2, 32, 4, 64   # batch, d_model, heads, ffn_dim

    # 1) f32 compute path, exact reciprocal softmax — tight correctness check.
    hs, mask, hm, params = _make_case(0, B, 8, D, H, F)
    ref = reference_layer(hs, mask, hm, params, H)
    out_f32 = whisper_encoder_layer(hs, mask, hm, params, num_heads=H,
                                    compute_dtype=jnp.float32, approx_softmax=False)
    out_f32 = jax.block_until_ready(out_f32)
    np.testing.assert_allclose(np.asarray(out_f32), np.asarray(ref),
                               atol=5e-4, rtol=5e-4)

    # 2) default fast path: bf16 matmul inputs, approx softmax reciprocal.
    out_bf16 = whisper_encoder_layer(hs, mask, hm, params, num_heads=H)
    out_bf16 = jax.block_until_ready(out_bf16)
    np.testing.assert_allclose(np.asarray(out_bf16), np.asarray(ref),
                               atol=3e-2, rtol=3e-2)

    # 3) non-multiple-of-8 sequence length — exercises the padding path.
    hs2, mask2, hm2, params2 = _make_case(1, B, 12, D, H, F)
    ref2 = reference_layer(hs2, mask2, hm2, params2, H)
    out2 = whisper_encoder_layer(hs2, mask2, hm2, params2, num_heads=H,
                                 compute_dtype=jnp.float32, approx_softmax=False)
    out2 = jax.block_until_ready(out2)
    np.testing.assert_allclose(np.asarray(out2), np.asarray(ref2),
                               atol=5e-4, rtol=5e-4)

    print("KERNEL_OK")
</pallas_src>

<mosaic_0001>
module attributes {stable_mosaic.version = 11 : i64} {
  func.func @_attn_block_kernel(%arg0: i32, %arg1: i32, %arg2: memref<1x8x32xf32, #tpu.memory_space<vmem>>, %arg3: memref<1x1x8xf32, #tpu.memory_space<vmem>>, %arg4: memref<1x32xf32, #tpu.memory_space<vmem>>, %arg5: memref<1x32xf32, #tpu.memory_space<vmem>>, %arg6: memref<32x32xf32, #tpu.memory_space<vmem>>, %arg7: memref<1x32xf32, #tpu.memory_space<vmem>>, %arg8: memref<32x32xf32, #tpu.memory_space<vmem>>, %arg9: memref<32x32xf32, #tpu.memory_space<vmem>>, %arg10: memref<1x32xf32, #tpu.memory_space<vmem>>, %arg11: memref<32x32xf32, #tpu.memory_space<vmem>>, %arg12: memref<1x32xf32, #tpu.memory_space<vmem>>, %arg13: memref<1x8x32xf32, #tpu.memory_space<vmem>>, %arg14: memref<8x32xf32, #tpu.memory_space<vmem>>, %arg15: memref<8x32xf32, #tpu.memory_space<vmem>>, %arg16: memref<8x32xf32, #tpu.memory_space<vmem>>, %arg17: memref<8x32xf32, #tpu.memory_space<vmem>>) attributes {dimension_semantics = [#tpu.dimension_semantics<parallel>, #tpu.dimension_semantics<arbitrary>], iteration_bounds = array<i64: 2, 1>, scalar_prefetch = 0 : i64, scratch_operands = 4 : i64, tpu.core_type = #tpu.core_type<tc>, window_params = [{transform_indices = @transform_0, window_bounds = array<i64: 1, 8, 32>}, {transform_indices = @transform_1, window_bounds = array<i64: 1, 1, 8>}, {pipeline_mode = #tpu.pipeline_mode<synchronous>, transform_indices = @transform_2, window_bounds = array<i64: 1, 32>}, {pipeline_mode = #tpu.pipeline_mode<synchronous>, transform_indices = @transform_3, window_bounds = array<i64: 1, 32>}, {pipeline_mode = #tpu.pipeline_mode<synchronous>, transform_indices = @transform_4, window_bounds = array<i64: 32, 32>}, {pipeline_mode = #tpu.pipeline_mode<synchronous>, transform_indices = @transform_5, window_bounds = array<i64: 1, 32>}, {pipeline_mode = #tpu.pipeline_mode<synchronous>, transform_indices = @transform_6, window_bounds = array<i64: 32, 32>}, {pipeline_mode = #tpu.pipeline_mode<synchronous>, transform_indices = @transform_7, window_bounds = array<i64: 32, 32>}, {pipeline_mode = #tpu.pipeline_mode<synchronous>, transform_indices = @transform_8, window_bounds = array<i64: 1, 32>}, {pipeline_mode = #tpu.pipeline_mode<synchronous>, transform_indices = @transform_9, window_bounds = array<i64: 32, 32>}, {pipeline_mode = #tpu.pipeline_mode<synchronous>, transform_indices = @transform_10, window_bounds = array<i64: 1, 32>}, {transform_indices = @transform_11, window_bounds = array<i64: 1, 8, 32>}]} {
    %c0_i32 = arith.constant 0 : i32
    %0 = arith.cmpi eq, %arg1, %c0_i32 : i32
    %1 = arith.extui %0 : i1 to i32
    %c0_i32_0 = arith.constant 0 : i32
    %c0_i32_1 = arith.constant 0 : i32
    %2 = arith.cmpi ne, %1, %c0_i32_1 : i32
    scf.if %2 {
      %125 = arith.index_cast %c0_i32_0 : i32 to index
      %c0_79 = arith.constant 0 : index
      %c0_80 = arith.constant 0 : index
      %126 = vector.load %arg2[%125, %c0_79, %c0_80] : memref<1x8x32xf32, #tpu.memory_space<vmem>>, vector<1x8x32xf32>
      %127 = vector.shape_cast %126 : vector<1x8x32xf32> to vector<8x32xf32>
      %c0_81 = arith.constant 0 : index
      %c0_82 = arith.constant 0 : index
      %128 = vector.load %arg4[%c0_81, %c0_82] : memref<1x32xf32, #tpu.memory_space<vmem>>, vector<1x32xf32>
      %c0_83 = arith.constant 0 : index
      %c0_84 = arith.constant 0 : index
      %129 = vector.load %arg5[%c0_83, %c0_84] : memref<1x32xf32, #tpu.memory_space<vmem>>, vector<1x32xf32>
      %cst_85 = arith.constant dense<0.000000e+00> : vector<8xf32>
      %130 = vector.multi_reduction <add>, %127, %cst_85 [1] : vector<8x32xf32> to vector<8xf32>
      %131 = vector.shape_cast %130 : vector<8xf32> to vector<8x1xf32>
      %cst_86 = arith.constant 3.200000e+01 : f32
      %132 = vector.broadcast %cst_86 : f32 to vector<8x1xf32>
      %133 = arith.divf %131, %132 : vector<8x1xf32>
      %134 = vector.broadcast %133 : vector<8x1xf32> to vector<8x32xf32>
      %135 = arith.subf %127, %134 : vector<8x32xf32>
      %136 = arith.mulf %135, %135 : vector<8x32xf32>
      %cst_87 = arith.constant dense<0.000000e+00> : vector<8xf32>
      %137 = vector.multi_reduction <add>, %136, %cst_87 [1] : vector<8x32xf32> to vector<8xf32>
      %138 = vector.shape_cast %137 : vector<8xf32> to vector<8x1xf32>
      %cst_88 = arith.constant 3.200000e+01 : f32
      %139 = vector.broadcast %cst_88 : f32 to vector<8x1xf32>
      %140 = arith.divf %138, %139 : vector<8x1xf32>
      %141 = vector.broadcast %133 : vector<8x1xf32> to vector<8x32xf32>
      %142 = arith.subf %127, %141 : vector<8x32xf32>
      %cst_89 = arith.constant 9.99999974E-6 : f32
      %143 = vector.broadcast %cst_89 : f32 to vector<8x1xf32>
      %144 = arith.addf %140, %143 : vector<8x1xf32>
      %145 = math.rsqrt %144 : vector<8x1xf32>
      %146 = vector.broadcast %145 : vector<8x1xf32> to vector<8x32xf32>
      %147 = arith.mulf %142, %146 : vector<8x32xf32>
      %148 = vector.broadcast %128 : vector<1x32xf32> to vector<8x32xf32>
      %149 = arith.mulf %147, %148 : vector<8x32xf32>
      %150 = vector.broadcast %129 : vector<1x32xf32> to vector<8x32xf32>
      %151 = arith.addf %149, %150 : vector<8x32xf32>
      %c0_90 = arith.constant 0 : index
      %c0_91 = arith.constant 0 : index
      %152 = vector.load %arg8[%c0_90, %c0_91] : memref<32x32xf32, #tpu.memory_space<vmem>>, vector<32x32xf32>
      %cst_92 = arith.constant dense<0.000000e+00> : vector<8x32xf32>
      %153 = tpu.matmul %151, %152, %cst_92 {dimension_numbers = #tpu.dot_dimension_numbers<[1], [0], [0], [1], [0, 0, 1, 1], [], []>} : vector<8x32xf32>, vector<32x32xf32>, vector<8x32xf32> -> vector<8x32xf32>
      %c0_93 = arith.constant 0 : index
      %c0_94 = arith.constant 0 : index
      %154 = vector.load %arg14[%c0_93, %c0_94] : memref<8x32xf32, #tpu.memory_space<vmem>>, vector<8x32xf32>
      tpu.vector_store %arg14[%c0_93, %c0_94], %153 {strides = array<i32>} : memref<8x32xf32, #tpu.memory_space<vmem>>, vector<8x32xf32>,
      %c0_95 = arith.constant 0 : index
      %c0_96 = arith.constant 0 : index
      %155 = vector.load %arg9[%c0_95, %c0_96] : memref<32x32xf32, #tpu.memory_space<vmem>>, vector<32x32xf32>
      %cst_97 = arith.constant dense<0.000000e+00> : vector<8x32xf32>
      %156 = tpu.matmul %151, %155, %cst_97 {dimension_numbers = #tpu.dot_dimension_numbers<[1], [0], [0], [1], [0, 0, 1, 1], [], []>} : vector<8x32xf32>, vector<32x32xf32>, vector<8x32xf32> -> vector<8x32xf32>
      %c0_98 = arith.constant 0 : index
      %c0_99 = arith.constant 0 : index
      %157 = vector.load %arg10[%c0_98, %c0_99] : memref<1x32xf32, #tpu.memory_space<vmem>>, vector<1x32xf32>
      %158 = vector.broadcast %157 : vector<1x32xf32> to vector<8x32xf32>
      %159 = arith.addf %156, %158 : vector<8x32xf32>
      %c0_100 = arith.constant 0 : index
      %c0_101 = arith.constant 0 : index
      %160 = vector.load %arg15[%c0_100, %c0_101] : memref<8x32xf32, #tpu.memory_space<vmem>>, vector<8x32xf32>
      tpu.vector_store %arg15[%c0_100, %c0_101], %159 {strides = array<i32>} : memref<8x32xf32, #tpu.memory_space<vmem>>, vector<8x32xf32>,
    } else {
    }
    %c8_i32 = arith.constant 8 : i32
    %3 = arith.muli %arg1, %c8_i32 : i32
    %4 = tpu.assume_multiple %3, 8 : i32
    %c0_i32_2 = arith.constant 0 : i32
    %c0_i32_3 = arith.constant 0 : i32
    %c0_i32_4 = arith.constant 0 : i32
    %5 = tpu.memref_slice %arg2[%c0_i32_2, %c0_i32_3, %c0_i32_4] : memref<1x8x32xf32, #tpu.memory_space<vmem>> -> memref<1x8x32xf32, #tpu.memory_space<vmem>>
    %6 = tpu.memref_squeeze %5 : memref<1x8x32xf32, #tpu.memory_space<vmem>> -> memref<8x32xf32, #tpu.memory_space<vmem>>
    %7 = arith.index_cast %4 : i32 to index
    %c0 = arith.constant 0 : index
    %8 = vector.load %6[%7, %c0] : memref<8x32xf32, #tpu.memory_space<vmem>>, vector<8x32xf32>
    %c0_5 = arith.constant 0 : index
    %c0_6 = arith.constant 0 : index
    %9 = vector.load %arg4[%c0_5, %c0_6] : memref<1x32xf32, #tpu.memory_space<vmem>>, vector<1x32xf32>
    %c0_7 = arith.constant 0 : index
    %c0_8 = arith.constant 0 : index
    %10 = vector.load %arg5[%c0_7, %c0_8] : memref<1x32xf32, #tpu.memory_space<vmem>>, vector<1x32xf32>
    %cst = arith.constant dense<0.000000e+00> : vector<8xf32>
    %11 = vector.multi_reduction <add>, %8, %cst [1] : vector<8x32xf32> to vector<8xf32>
    %12 = vector.shape_cast %11 : vector<8xf32> to vector<8x1xf32>
    %cst_9 = arith.constant 3.200000e+01 : f32
    %13 = vector.broadcast %cst_9 : f32 to vector<8x1xf32>
    %14 = arith.divf %12, %13 : vector<8x1xf32>
    %15 = vector.broadcast %14 : vector<8x1xf32> to vector<8x32xf32>
    %16 = arith.subf %8, %15 : vector<8x32xf32>
    %17 = arith.mulf %16, %16 : vector<8x32xf32>
    %cst_10 = arith.constant dense<0.000000e+00> : vector<8xf32>
    %18 = vector.multi_reduction <add>, %17, %cst_10 [1] : vector<8x32xf32> to vector<8xf32>
    %19 = vector.shape_cast %18 : vector<8xf32> to vector<8x1xf32>
    %cst_11 = arith.constant 3.200000e+01 : f32
    %20 = vector.broadcast %cst_11 : f32 to vector<8x1xf32>
    %21 = arith.divf %19, %20 : vector<8x1xf32>
    %22 = vector.broadcast %14 : vector<8x1xf32> to vector<8x32xf32>
    %23 = arith.subf %8, %22 : vector<8x32xf32>
    %cst_12 = arith.constant 9.99999974E-6 : f32
    %24 = vector.broadcast %cst_12 : f32 to vector<8x1xf32>
    %25 = arith.addf %21, %24 : vector<8x1xf32>
    %26 = math.rsqrt %25 : vector<8x1xf32>
    %27 = vector.broadcast %26 : vector<8x1xf32> to vector<8x32xf32>
    %28 = arith.mulf %23, %27 : vector<8x32xf32>
    %29 = vector.broadcast %9 : vector<1x32xf32> to vector<8x32xf32>
    %30 = arith.mulf %28, %29 : vector<8x32xf32>
    %31 = vector.broadcast %10 : vector<1x32xf32> to vector<8x32xf32>
    %32 = arith.addf %30, %31 : vector<8x32xf32>
    %c0_13 = arith.constant 0 : index
    %c0_14 = arith.constant 0 : index
    %33 = vector.load %arg6[%c0_13, %c0_14] : memref<32x32xf32, #tpu.memory_space<vmem>>, vector<32x32xf32>
    %cst_15 = arith.constant dense<0.000000e+00> : vector<8x32xf32>
    %34 = tpu.matmul %32, %33, %cst_15 {dimension_numbers = #tpu.dot_dimension_numbers<[1], [0], [0], [1], [0, 0, 1, 1], [], []>} : vector<8x32xf32>, vector<32x32xf32>, vector<8x32xf32> -> vector<8x32xf32>
    %c0_16 = arith.constant 0 : index
    %c0_17 = arith.constant 0 : index
    %35 = vector.load %arg7[%c0_16, %c0_17] : memref<1x32xf32, #tpu.memory_space<vmem>>, vector<1x32xf32>
    %36 = vector.broadcast %35 : vector<1x32xf32> to vector<8x32xf32>
    %37 = arith.addf %34, %36 : vector<8x32xf32>
    %cst_18 = arith.constant 0.353553385 : f32
    %38 = vector.broadcast %cst_18 : f32 to vector<8x32xf32>
    %39 = arith.mulf %37, %38 : vector<8x32xf32>
    %c0_19 = arith.constant 0 : index
    %c0_20 = arith.constant 0 : index
    %40 = vector.load %arg16[%c0_19, %c0_20] : memref<8x32xf32, #tpu.memory_space<vmem>>, vector<8x32xf32>
    tpu.vector_store %arg16[%c0_19, %c0_20], %39 {strides = array<i32>} : memref<8x32xf32, #tpu.memory_space<vmem>>, vector<8x32xf32>,
    %c0_21 = arith.constant 0 : index
    %c0_22 = arith.constant 0 : index
    %c0_23 = arith.constant 0 : index
    %41 = vector.load %arg3[%c0_21, %c0_22, %c0_23] : memref<1x1x8xf32, #tpu.memory_space<vmem>>, vector<1x1x8xf32>
    %42 = vector.shape_cast %41 : vector<1x1x8xf32> to vector<1x8xf32>
    %c0_24 = arith.constant 0 : index
    %c0_25 = arith.constant 0 : index
    %43 = vector.load %arg16[%c0_24, %c0_25] : memref<8x32xf32, #tpu.memory_space<vmem>>, vector<8x8xf32>
    %c0_26 = arith.constant 0 : index
    %c0_27 = arith.constant 0 : index
    %44 = vector.load %arg14[%c0_26, %c0_27] : memref<8x32xf32, #tpu.memory_space<vmem>>, vector<8x8xf32>
    %cst_28 = arith.constant dense<0.000000e+00> : vector<8x8xf32>
    %45 = tpu.matmul %43, %44, %cst_28 {dimension_numbers = #tpu.dot_dimension_numbers<[1], [1], [0], [0], [0, 0, 1, 0], [], []>} : vector<8x8xf32>, vector<8x8xf32>, vector<8x8xf32> -> vector<8x8xf32>
    %46 = vector.broadcast %42 : vector<1x8xf32> to vector<8x8xf32>
    %47 = arith.addf %45, %46 : vector<8x8xf32>
    %cst_29 = arith.constant dense<0xFF800000> : vector<8xf32>
    %48 = vector.multi_reduction <maximumf>, %47, %cst_29 [1] : vector<8x8xf32> to vector<8xf32>
    %49 = vector.shape_cast %48 : vector<8xf32> to vector<8x1xf32>
    %50 = vector.broadcast %49 : vector<8x1xf32> to vector<8x8xf32>
    %51 = arith.subf %47, %50 : vector<8x8xf32>
    %52 = math.exp %51 : vector<8x8xf32>
    %cst_30 = arith.constant dense<0.000000e+00> : vector<8xf32>
    %53 = vector.multi_reduction <add>, %52, %cst_30 [1] : vector<8x8xf32> to vector<8xf32>
    %54 = vector.shape_cast %53 : vector<8xf32> to vector<8x1xf32>
    %55 = tpu.reciprocal %54 : vector<8x1xf32> -> vector<8x1xf32>
    %56 = vector.broadcast %55 : vector<8x1xf32> to vector<8x8xf32>
    %57 = arith.mulf %52, %56 : vector<8x8xf32>
    %c0_31 = arith.constant 0 : index
    %c0_32 = arith.constant 0 : index
    %58 = vector.load %arg15[%c0_31, %c0_32] : memref<8x32xf32, #tpu.memory_space<vmem>>, vector<8x8xf32>
    %cst_33 = arith.constant dense<0.000000e+00> : vector<8x8xf32>
    %59 = tpu.matmul %57, %58, %cst_33 {dimension_numbers = #tpu.dot_dimension_numbers<[1], [0], [0], [1], [0, 0, 1, 1], [], []>} : vector<8x8xf32>, vector<8x8xf32>, vector<8x8xf32> -> vector<8x8xf32>
    %c0_34 = arith.constant 0 : index
    %c0_35 = arith.constant 0 : index
    %60 = vector.load %arg17[%c0_34, %c0_35] : memref<8x32xf32, #tpu.memory_space<vmem>>, vector<8x8xf32>
    tpu.vector_store %arg17[%c0_34, %c0_35], %59 {strides = array<i32>} : memref<8x32xf32, #tpu.memory_space<vmem>>, vector<8x8xf32>,
    %c0_36 = arith.constant 0 : index
    %c8 = arith.constant 8 : index
    %61 = vector.load %arg16[%c0_36, %c8] : memref<8x32xf32, #tpu.memory_space<vmem>>, vector<8x8xf32>
    %c0_37 = arith.constant 0 : index
    %c8_38 = arith.constant 8 : index
    %62 = vector.load %arg14[%c0_37, %c8_38] : memref<8x32xf32, #tpu.memory_space<vmem>>, vector<8x8xf32>
    %cst_39 = arith.constant dense<0.000000e+00> : vector<8x8xf32>
    %63 = tpu.matmul %61, %62, %cst_39 {dimension_numbers = #tpu.dot_dimension_numbers<[1], [1], [0], [0], [0, 0, 1, 0], [], []>} : vector<8x8xf32>, vector<8x8xf32>, vector<8x8xf32> -> vector<8x8xf32>
    %64 = vector.broadcast %42 : vector<1x8xf32> to vector<8x8xf32>
    %65 = arith.addf %63, %64 : vector<8x8xf32>
    %cst_40 = arith.constant dense<0xFF800000> : vector<8xf32>
    %66 = vector.multi_reduction <maximumf>, %65, %cst_40 [1] : vector<8x8xf32> to vector<8xf32>
    %67 = vector.shape_cast %66 : vector<8xf32> to vector<8x1xf32>
    %68 = vector.broadcast %67 : vector<8x1xf32> to vector<8x8xf32>
    %69 = arith.subf %65, %68 : vector<8x8xf32>
    %70 = math.exp %69 : vector<8x8xf32>
    %cst_41 = arith.constant dense<0.000000e+00> : vector<8xf32>
    %71 = vector.multi_reduction <add>, %70, %cst_41 [1] : vector<8x8xf32> to vector<8xf32>
    %72 = vector.shape_cast %71 : vector<8xf32> to vector<8x1xf32>
    %73 = tpu.reciprocal %72 : vector<8x1xf32> -> vector<8x1xf32>
    %74 = vector.broadcast %73 : vector<8x1xf32> to vector<8x8xf32>
    %75 = arith.mulf %70, %74 : vector<8x8xf32>
    %c0_42 = arith.constant 0 : index
    %c8_43 = arith.constant 8 : index
    %76 = vector.load %arg15[%c0_42, %c8_43] : memref<8x32xf32, #tpu.memory_space<vmem>>, vector<8x8xf32>
    %cst_44 = arith.constant dense<0.000000e+00> : vector<8x8xf32>
    %77 = tpu.matmul %75, %76, %cst_44 {dimension_numbers = #tpu.dot_dimension_numbers<[1], [0], [0], [1], [0, 0, 1, 1], [], []>} : vector<8x8xf32>, vector<8x8xf32>, vector<8x8xf32> -> vector<8x8xf32>
    %c0_45 = arith.constant 0 : index
    %c8_46 = arith.constant 8 : index
    %78 = vector.load %arg17[%c0_45, %c8_46] : memref<8x32xf32, #tpu.memory_space<vmem>>, vector<8x8xf32>
    tpu.vector_store %arg17[%c0_45, %c8_46], %77 {strides = array<i32>} : memref<8x32xf32, #tpu.memory_space<vmem>>, vector<8x8xf32>,
    %c0_47 = arith.constant 0 : index
    %c16 = arith.constant 16 : index
    %79 = vector.load %arg16[%c0_47, %c16] : memref<8x32xf32, #tpu.memory_space<vmem>>, vector<8x8xf32>
    %c0_48 = arith.constant 0 : index
    %c16_49 = arith.constant 16 : index
    %80 = vector.load %arg14[%c0_48, %c16_49] : memref<8x32xf32, #tpu.memory_space<vmem>>, vector<8x8xf32>
    %cst_50 = arith.constant dense<0.000000e+00> : vector<8x8xf32>
    %81 = tpu.matmul %79, %80, %cst_50 {dimension_numbers = #tpu.dot_dimension_numbers<[1], [1], [0], [0], [0, 0, 1, 0], [], []>} : vector<8x8xf32>, vector<8x8xf32>, vector<8x8xf32> -> vector<8x8xf32>
    %82 = vector.broadcast %42 : vector<1x8xf32> to vector<8x8xf32>
    %83 = arith.addf %81, %82 : vector<8x8xf32>
    %cst_51 = arith.constant dense<0xFF800000> : vector<8xf32>
    %84 = vector.multi_reduction <maximumf>, %83, %cst_51 [1] : vector<8x8xf32> to vector<8xf32>
    %85 = vector.shape_cast %84 : vector<8xf32> to vector<8x1xf32>
    %86 = vector.broadcast %85 : vector<8x1xf32> to vector<8x8xf32>
    %87 = arith.subf %83, %86 : vector<8x8xf32>
    %88 = math.exp %87 : vector<8x8xf32>
    %cst_52 = arith.constant dense<0.000000e+00> : vector<8xf32>
    %89 = vector.multi_reduction <add>, %88, %cst_52 [1] : vector<8x8xf32> to vector<8xf32>
    %90 = vector.shape_cast %89 : vector<8xf32> to vector<8x1xf32>
    %91 = tpu.reciprocal %90 : vector<8x1xf32> -> vector<8x1xf32>
    %92 = vector.broadcast %91 : vector<8x1xf32> to vector<8x8xf32>
    %93 = arith.mulf %88, %92 : vector<8x8xf32>
    %c0_53 = arith.constant 0 : index
    %c16_54 = arith.constant 16 : index
    %94 = vector.load %arg15[%c0_53, %c16_54] : memref<8x32xf32, #tpu.memory_space<vmem>>, vector<8x8xf32>
    %cst_55 = arith.constant dense<0.000000e+00> : vector<8x8xf32>
    %95 = tpu.matmul %93, %94, %cst_55 {dimension_numbers = #tpu.dot_dimension_numbers<[1], [0], [0], [1], [0, 0, 1, 1], [], []>} : vector<8x8xf32>, vector<8x8xf32>, vector<8x8xf32> -> vector<8x8xf32>
    %c0_56 = arith.constant 0 : index
    %c16_57 = arith.constant 16 : index
    %96 = vector.load %arg17[%c0_56, %c16_57] : memref<8x32xf32, #tpu.memory_space<vmem>>, vector<8x8xf32>
    tpu.vector_store %arg17[%c0_56, %c16_57], %95 {strides = array<i32>} : memref<8x32xf32, #tpu.memory_space<vmem>>, vector<8x8xf32>,
    %c0_58 = arith.constant 0 : index
    %c24 = arith.constant 24 : index
    %97 = vector.load %arg16[%c0_58, %c24] : memref<8x32xf32, #tpu.memory_space<vmem>>, vector<8x8xf32>
    %c0_59 = arith.constant 0 : index
    %c24_60 = arith.constant 24 : index
    %98 = vector.load %arg14[%c0_59, %c24_60] : memref<8x32xf32, #tpu.memory_space<vmem>>, vector<8x8xf32>
    %cst_61 = arith.constant dense<0.000000e+00> : vector<8x8xf32>
    %99 = tpu.matmul %97, %98, %cst_61 {dimension_numbers = #tpu.dot_dimension_numbers<[1], [1], [0], [0], [0, 0, 1, 0], [], []>} : vector<8x8xf32>, vector<8x8xf32>, vector<8x8xf32> -> vector<8x8xf32>
    %100 = vector.broadcast %42 : vector<1x8xf32> to vector<8x8xf32>
    %101 = arith.addf %99, %100 : vector<8x8xf32>
    %cst_62 = arith.constant dense<0xFF800000> : vector<8xf32>
    %102 = vector.multi_reduction <maximumf>, %101, %cst_62 [1] : vector<8x8xf32> to vector<8xf32>
    %103 = vector.shape_cast %102 : vector<8xf32> to vector<8x1xf32>
    %104 = vector.broadcast %103 : vector<8x1xf32> to vector<8x8xf32>
    %105 = arith.subf %101, %104 : vector<8x8xf32>
    %106 = math.exp %105 : vector<8x8xf32>
    %cst_63 = arith.constant dense<0.000000e+00> : vector<8xf32>
    %107 = vector.multi_reduction <add>, %106, %cst_63 [1] : vector<8x8xf32> to vector<8xf32>
    %108 = vector.shape_cast %107 : vector<8xf32> to vector<8x1xf32>
    %109 = tpu.reciprocal %108 : vector<8x1xf32> -> vector<8x1xf32>
    %110 = vector.broadcast %109 : vector<8x1xf32> to vector<8x8xf32>
    %111 = arith.mulf %106, %110 : vector<8x8xf32>
    %c0_64 = arith.constant 0 : index
    %c24_65 = arith.constant 24 : index
    %112 = vector.load %arg15[%c0_64, %c24_65] : memref<8x32xf32, #tpu.memory_space<vmem>>, vector<8x8xf32>
    %cst_66 = arith.constant dense<0.000000e+00> : vector<8x8xf32>
    %113 = tpu.matmul %111, %112, %cst_66 {dimension_numbers = #tpu.dot_dimension_numbers<[1], [0], [0], [1], [0, 0, 1, 1], [], []>} : vector<8x8xf32>, vector<8x8xf32>, vector<8x8xf32> -> vector<8x8xf32>
    %c0_67 = arith.constant 0 : index
    %c24_68 = arith.constant 24 : index
    %114 = vector.load %arg17[%c0_67, %c24_68] : memref<8x32xf32, #tpu.memory_space<vmem>>, vector<8x8xf32>
    tpu.vector_store %arg17[%c0_67, %c24_68], %113 {strides = array<i32>} : memref<8x32xf32, #tpu.memory_space<vmem>>, vector<8x8xf32>,
    %c0_69 = arith.constant 0 : index
    %c0_70 = arith.constant 0 : index
    %115 = vector.load %arg17[%c0_69, %c0_70] : memref<8x32xf32, #tpu.memory_space<vmem>>, vector<8x32xf32>
    %c0_71 = arith.constant 0 : index
    %c0_72 = arith.constant 0 : index
    %116 = vector.load %arg11[%c0_71, %c0_72] : memref<32x32xf32, #tpu.memory_space<vmem>>, vector<32x32xf32>
    %cst_73 = arith.constant dense<0.000000e+00> : vector<8x32xf32>
    %117 = tpu.matmul %115, %116, %cst_73 {dimension_numbers = #tpu.dot_dimension_numbers<[1], [0], [0], [1], [0, 0, 1, 1], [], []>} : vector<8x32xf32>, vector<32x32xf32>, vector<8x32xf32> -> vector<8x32xf32>
    %118 = arith.addf %8, %117 : vector<8x32xf32>
    %c0_74 = arith.constant 0 : index
    %c0_75 = arith.constant 0 : index
    %119 = vector.load %arg12[%c0_74, %c0_75] : memref<1x32xf32, #tpu.memory_space<vmem>>, vector<1x32xf32>
    %120 = vector.broadcast %119 : vector<1x32xf32> to vector<8x32xf32>
    %121 = arith.addf %118, %120 : vector<8x32xf32>
    %c0_76 = arith.constant 0 : index
    %c0_77 = arith.constant 0 : index
    %c0_78 = arith.constant 0 : index
    %122 = vector.load %arg13[%c0_76, %c0_77, %c0_78] : memref<1x8x32xf32, #tpu.memory_space<vmem>>, vector<1x8x32xf32>
    %123 = vector.shape_cast %122 : vector<1x8x32xf32> to vector<8x32xf32>
    %124 = vector.shape_cast %121 : vector<8x32xf32> to vector<1x8x32xf32>
    tpu.vector_store %arg13[%c0_76, %c0_77, %c0_78], %124 {strides = array<i32>} : memref<1x8x32xf32, #tpu.memory_space<vmem>>, vector<1x8x32xf32>,
    return
  }
  func.func @transform_0(%arg0: i32, %arg1: i32) -> (i32, i32, i32) {
    %c0_i32 = arith.constant 0 : i32
    %c0_i32_0 = arith.constant 0 : i32
    %c0_i32_1 = arith.constant 0 : i32
    return %arg0, %c0_i32, %c0_i32_0 : i32, i32, i32
  }
  func.func @transform_1(%arg0: i32, %arg1: i32) -> (i32, i32, i32) {
    %c0_i32 = arith.constant 0 : i32
    %c0_i32_0 = arith.constant 0 : i32
    %c0_i32_1 = arith.constant 0 : i32
    return %arg0, %c0_i32, %c0_i32_0 : i32, i32, i32
  }
  func.func @transform_2(%arg0: i32, %arg1: i32) -> (i32, i32) {
    %c0_i32 = arith.constant 0 : i32
    %c0_i32_0 = arith.constant 0 : i32
    %c0_i32_1 = arith.constant 0 : i32
    return %c0_i32, %c0_i32_0 : i32, i32
  }
  func.func @transform_3(%arg0: i32, %arg1: i32) -> (i32, i32) {
    %c0_i32 = arith.constant 0 : i32
    %c0_i32_0 = arith.constant 0 : i32
    %c0_i32_1 = arith.constant 0 : i32
    return %c0_i32, %c0_i32_0 : i32, i32
  }
  func.func @transform_4(%arg0: i32, %arg1: i32) -> (i32, i32) {
    %c0_i32 = arith.constant 0 : i32
    %c0_i32_0 = arith.constant 0 : i32
    %c0_i32_1 = arith.constant 0 : i32
    return %c0_i32, %c0_i32_0 : i32, i32
  }
  func.func @transform_5(%arg0: i32, %arg1: i32) -> (i32, i32) {
    %c0_i32 = arith.constant 0 : i32
    %c0_i32_0 = arith.constant 0 : i32
    %c0_i32_1 = arith.constant 0 : i32
    return %c0_i32, %c0_i32_0 : i32, i32
  }
  func.func @transform_6(%arg0: i32, %arg1: i32) -> (i32, i32) {
    %c0_i32 = arith.constant 0 : i32
    %c0_i32_0 = arith.constant 0 : i32
    %c0_i32_1 = arith.constant 0 : i32
    return %c0_i32, %c0_i32_0 : i32, i32
  }
  func.func @transform_7(%arg0: i32, %arg1: i32) -> (i32, i32) {
    %c0_i32 = arith.constant 0 : i32
    %c0_i32_0 = arith.constant 0 : i32
    %c0_i32_1 = arith.constant 0 : i32
    return %c0_i32, %c0_i32_0 : i32, i32
  }
  func.func @transform_8(%arg0: i32, %arg1: i32) -> (i32, i32) {
    %c0_i32 = arith.constant 0 : i32
    %c0_i32_0 = arith.constant 0 : i32
    %c0_i32_1 = arith.constant 0 : i32
    return %c0_i32, %c0_i32_0 : i32, i32
  }
  func.func @transform_9(%arg0: i32, %arg1: i32) -> (i32, i32) {
    %c0_i32 = arith.constant 0 : i32
    %c0_i32_0 = arith.constant 0 : i32
    %c0_i32_1 = arith.constant 0 : i32
    return %c0_i32, %c0_i32_0 : i32, i32
  }
  func.func @transform_10(%arg0: i32, %arg1: i32) -> (i32, i32) {
    %c0_i32 = arith.constant 0 : i32
    %c0_i32_0 = arith.constant 0 : i32
    %c0_i32_1 = arith.constant 0 : i32
    return %c0_i32, %c0_i32_0 : i32, i32
  }
  func.func @transform_11(%arg0: i32, %arg1: i32) -> (i32, i32, i32) {
    %c0_i32 = arith.constant 0 : i32
    %c0_i32_0 = arith.constant 0 : i32
    return %arg0, %arg1, %c0_i32 : i32, i32, i32
  }
}

</mosaic_0001>

<llo_original>
// kernel: tpu_custom_call.1
$region0: #{tpu_custom_call.1}
  #allocation0 [shape = 'u32[]', space=smem, size = 0x4, offset = 0x4, fixed_abs, tag = 'smem constant byte address 0x4 - core index']
  #allocation1 [shape = 'u32[72,128]{1,0:T(1,128)}', space=vmem, size = 0x9000, scoped, tag = 'internal scratch']
  #allocation2 [shape = 'f32[8,32]{1,0:T(8,128)}', space=vmem, size = 0x1000, scoped, tag = 'scratch operand']
  #allocation3 [shape = 'f32[8,32]{1,0:T(8,128)}', space=vmem, size = 0x1000, scoped, tag = 'scratch operand']
  #allocation4 [shape = 'f32[8,32]{1,0:T(8,128)}', space=vmem, size = 0x1000, scoped, tag = 'scratch operand']
  #allocation5 [shape = 'f32[8,32]{1,0:T(8,128)}', space=vmem, size = 0x1000, scoped, tag = 'scratch operand']
  %s0 = inlined_call_operand.hbm [shape: f32[2,8,32], index: 0, kind: input, shape index: {}]
  %s1 = inlined_call_operand.hbm [shape: f32[2,1,8], index: 1, kind: input, shape index: {}]
  %s2 = inlined_call_operand.vmem [shape: f32[1,32], index: 2, kind: input, shape index: {}]
  %s3 = inlined_call_operand.vmem [shape: f32[1,32], index: 3, kind: input, shape index: {}]
  %s4 = inlined_call_operand.hbm [shape: f32[32,32], index: 4, kind: input, shape index: {}]
  %s5 = inlined_call_operand.vmem [shape: f32[1,32], index: 5, kind: input, shape index: {}]
  %s6 = inlined_call_operand.hbm [shape: f32[32,32], index: 6, kind: input, shape index: {}]
  %s7 = inlined_call_operand.hbm [shape: f32[32,32], index: 7, kind: input, shape index: {}]
  %s8 = inlined_call_operand.vmem [shape: f32[1,32], index: 8, kind: input, shape index: {}]
  %s9 = inlined_call_operand.hbm [shape: f32[32,32], index: 9, kind: input, shape index: {}]
  %s10 = inlined_call_operand.vmem [shape: f32[1,32], index: 10, kind: input, shape index: {}]
  %s11 = inlined_call_operand.hbm [shape: f32[2,8,32], index: 11, kind: output, shape index: {}]
  %s12 = sld [smem:[#allocation0]]
  $region105: #{tpu_custom_call.1} parent=0
    _
  %s14 = ssub.s32 1, %s12
  %s15 = scalar_select 0, %s14, %s12
  $region1: #{tpu_custom_call.1} parent=0
    #allocation6 [shape = 'u8[8192]{0}', space=vmem, size = 0x2000, scoped, tag = 'input window, operand 0']
    #allocation7 [shape = 's32[2]{0}', space=sflag, size = 0x8, scoped, tag = 'scoped memory for tpu_custom_call.1']
    #allocation8 [shape = 's32[2]{0}', space=sflag, size = 0x8, scoped, tag = 'scoped memory for tpu_custom_call.1']
    #allocation9 [shape = 'u8[1024]{0}', space=vmem, size = 0x400, scoped, tag = 'input window, operand 1']
    #allocation10 [shape = 's32[2]{0}', space=sflag, size = 0x8, scoped, tag = 'scoped memory for tpu_custom_call.1']
    #allocation11 [shape = 'u8[16384]{0}', space=vmem, size = 0x4000, scoped, tag = 'input window, operand 4, single buffered']
    #allocation12 [shape = 'u8[16384]{0}', space=vmem, size = 0x4000, scoped, tag = 'input window, operand 6, single buffered']
    #allocation13 [shape = 's32[1]{0}', space=sflag, size = 0x4, scoped, tag = 'scoped memory for tpu_custom_call.1']
    #allocation14 [shape = 'u8[16384]{0}', space=vmem, size = 0x4000, scoped, tag = 'input window, operand 7, single buffered']
    #allocation15 [shape = 'u8[16384]{0}', space=vmem, size = 0x4000, scoped, tag = 'input window, operand 9, single buffered']
    #allocation16 [shape = 's32[1]{0}', space=sflag, size = 0x4, scoped, tag = 'scoped memory for tpu_custom_call.1']
    #allocation17 [shape = 'u8[8192]{0}', space=vmem, size = 0x2000, scoped, tag = 'output window, operand 0']
    %16 = vsyncpa [#allocation7], 0
    %s17 = scalar_lea.sflag [#allocation7], 1
    %18 = vsyncpa %s17, 0
    %19 = vsyncpa [#allocation10], 0
    %s20 = scalar_lea.sflag [#allocation10], 1
    %21 = vsyncpa %s20, 0
    %22 = vsyncpa [#allocation13], 0
    %23 = vsyncpa [#allocation16], 0
    %24 = vsyncpa [#allocation8], 0
    %s25 = scalar_lea.sflag [#allocation8], 1
    %26 = vsyncpa %s25, 0
    loop: start=0, step=1, limit=4
    $region2: #{tpu_custom_call.1} parent=1 // loop_pre_header
      _
    $region3: #{tpu_custom_call.1} parent=1 // loop_header
      %s28 = sphi 0, %s32
      %p29 = scmp.ge.s32.totalorder %s28, 4
      %s35 = sphi 0, %s47
      %s36 = sphi 0, %s43
      %s37 = sphi 0, %s35
      %s38 = sphi 0, %s36
      %s39 = sphi 0, %s37
      %s40 = sphi 0, %s38
      %s50 = sphi 0, %s52
      %s53 = sphi 0, %s50
      %s54 = sphi 0, %s53
      %s70 = sphi 0, %s54
      %s76 = sphi 0, %s78
      %s79 = sphi 0, %s76
      %s80 = sphi 0, %s79
      %s96 = sphi 0, %s80
      %s100 = sphi 0, %s100
      %s102 = sphi 0, %s100
      %s103 = sphi 0, %s102
      %s117 = sphi 0, %s103
      %s121 = sphi 0, %s121
      %s123 = sphi 0, %s121
      %s124 = sphi 0, %s123
      %s138 = sphi 0, %s124
      %s142 = sphi 0, %s142
      %s144 = sphi 0, %s142
      %s145 = sphi 0, %s144
      %s159 = sphi 0, %s145
      %s163 = sphi 0, %s163
      %s165 = sphi 0, %s163
      %s166 = sphi 0, %s165
      %s180 = sphi 0, %s166
      %s184 = sphi 0, %s184
      %s186 = sphi 0, %s184
      %s187 = sphi 0, %s186
      %s201 = sphi 0, %s187
      %s205 = sphi 0, %s205
      %s207 = sphi 0, %s205
      %s208 = sphi 0, %s207
      %s222 = sphi 0, %s208
      %s226 = sphi 0, %s226
      %s228 = sphi 0, %s226
      %s229 = sphi 0, %s228
      %s243 = sphi 0, %s229
      %s247 = sphi 0, %s247
      %s249 = sphi 0, %s247
      %s250 = sphi 0, %s249
      %s264 = sphi 0, %s250
      %s268 = sphi 0, %s268
      %s270 = sphi 0, %s268
      %s271 = sphi 0, %s270
      %s285 = sphi 0, %s271
      %s293 = sphi 0, %s295
      %s296 = sphi 0, %s293
      %s297 = sphi 0, %s296
      %s313 = sphi 0, %s297
    $region4: #{tpu_custom_call.1} parent=1 // loop_header_branch
      %31 = sbr.rel (%p29) target = $region8
    $region5: #{tpu_custom_call.1} parent=1 // loop_body
      %s33 = ssub.s32 %s28, 1
      %s34 = ssub.s32 %s28, 2
      %s41 = sadd.s32 1, %s36
      %p42 = scmp.ge.s32.totalorder %s41, 1
      %s43 = scalar_select %p42, 0, %s41
      %s44 = sadd.s32 1, %s35
      %s45 = scalar_select %p42, %s44, %s35
      %p46 = scmp.ge.s32.totalorder %s45, 2
      %s47 = scalar_select %p46, 0, %s45
      %s48 = ssub.s32 %s35, %s47
      %p49 = scmp.eq.s32.totalorder %s48, 0
      %s51 = sadd.s32 %s50, 1
      %s52 = scalar_select %p49, %s50, %s51
      %p55 = pneg %p49
      %p56 = scmp.eq.s32.totalorder %s28, 1
      %p57 = por %p55, %p56
      %p58 = scmp.ne.s32.totalorder %s50, %s53
      %p59 = scmp.eq.s32.totalorder %s28, 0
      %p60 = por %p58, %p59
      %p61 = scmp.ne.s32.totalorder %s50, %s53
      %p62 = scmp.eq.s32.totalorder %s33, 1
      %p63 = por %p61, %p62
      %p64 = scmp.ne.s32.totalorder %s53, %s54
      %p65 = scmp.eq.s32.totalorder %s33, 0
      %p66 = por %p64, %p65
      %p67 = scmp.ne.s32.totalorder %s53, %s54
      %p68 = scmp.eq.s32.totalorder %s34, 1
      %p69 = por %p67, %p68
      %p71 = scmp.ne.s32.totalorder %s54, %s70
      %p72 = scmp.eq.s32.totalorder %s34, 0
      %p73 = por %p71, %p72
      %s74 = ssub.s32 %s35, %s47
      %p75 = scmp.eq.s32.totalorder %s74, 0
      %s77 = sadd.s32 %s76, 1
      %s78 = scalar_select %p75, %s76, %s77
      %p81 = pneg %p75
      %p82 = scmp.eq.s32.totalorder %s28, 1
      %p83 = por %p81, %p82
      %p84 = scmp.ne.s32.totalorder %s76, %s79
      %p85 = scmp.eq.s32.totalorder %s28, 0
      %p86 = por %p84, %p85
      %p87 = scmp.ne.s32.totalorder %s76, %s79
      %p88 = scmp.eq.s32.totalorder %s33, 1
      %p89 = por %p87, %p88
      %p90 = scmp.ne.s32.totalorder %s79, %s80
      %p91 = scmp.eq.s32.totalorder %s33, 0
      %p92 = por %p90, %p91
      %p93 = scmp.ne.s32.totalorder %s79, %s80
      %p94 = scmp.eq.s32.totalorder %s34, 1
      %p95 = por %p93, %p94
      %p97 = scmp.ne.s32.totalorder %s80, %s96
      %p98 = scmp.eq.s32.totalorder %s34, 0
      %p99 = por %p97, %p98
      %s101 = sadd.s32 %s100, 1
      %p104 = scmp.eq.s32.totalorder %s28, 1
      %p105 = scmp.ne.s32.totalorder %s100, %s102
      %p106 = scmp.eq.s32.totalorder %s28, 0
      %p107 = por %p105, %p106
      %p108 = scmp.ne.s32.totalorder %s100, %s102
      %p109 = scmp.eq.s32.totalorder %s33, 1
      %p110 = por %p108, %p109
      %p111 = scmp.ne.s32.totalorder %s102, %s103
      %p112 = scmp.eq.s32.totalorder %s33, 0
      %p113 = por %p111, %p112
      %p114 = scmp.ne.s32.totalorder %s102, %s103
      %p115 = scmp.eq.s32.totalorder %s34, 1
      %p116 = por %p114, %p115
      %p118 = scmp.ne.s32.totalorder %s103, %s117
      %p119 = scmp.eq.s32.totalorder %s34, 0
      %p120 = por %p118, %p119
      %s122 = sadd.s32 %s121, 1
      %p125 = scmp.eq.s32.totalorder %s28, 1
      %p126 = scmp.ne.s32.totalorder %s121, %s123
      %p127 = scmp.eq.s32.totalorder %s28, 0
      %p128 = por %p126, %p127
      %p129 = scmp.ne.s32.totalorder %s121, %s123
      %p130 = scmp.eq.s32.totalorder %s33, 1
      %p131 = por %p129, %p130
      %p132 = scmp.ne.s32.totalorder %s123, %s124
      %p133 = scmp.eq.s32.totalorder %s33, 0
      %p134 = por %p132, %p133
      %p135 = scmp.ne.s32.totalorder %s123, %s124
      %p136 = scmp.eq.s32.totalorder %s34, 1
      %p137 = por %p135, %p136
      %p139 = scmp.ne.s32.totalorder %s124, %s138
      %p140 = scmp.eq.s32.totalorder %s34, 0
      %p141 = por %p139, %p140
      %s143 = sadd.s32 %s142, 1
      %p146 = scmp.eq.s32.totalorder %s28, 1
      %p147 = scmp.ne.s32.totalorder %s142, %s144
      %p148 = scmp.eq.s32.totalorder %s28, 0
      %p149 = por %p147, %p148
      %p150 = scmp.ne.s32.totalorder %s142, %s144
      %p151 = scmp.eq.s32.totalorder %s33, 1
      %p152 = por %p150, %p151
      %p153 = scmp.ne.s32.totalorder %s144, %s145
      %p154 = scmp.eq.s32.totalorder %s33, 0
      %p155 = por %p153, %p154
      %p156 = scmp.ne.s32.totalorder %s144, %s145
      %p157 = scmp.eq.s32.totalorder %s34, 1
      %p158 = por %p156, %p157
      %p160 = scmp.ne.s32.totalorder %s145, %s159
      %p161 = scmp.eq.s32.totalorder %s34, 0
      %p162 = por %p160, %p161
      %s164 = sadd.s32 %s163, 1
      %p167 = scmp.eq.s32.totalorder %s28, 1
      %p168 = scmp.ne.s32.totalorder %s163, %s165
      %p169 = scmp.eq.s32.totalorder %s28, 0
      %p170 = por %p168, %p169
      %p171 = scmp.ne.s32.totalorder %s163, %s165
      %p172 = scmp.eq.s32.totalorder %s33, 1
      %p173 = por %p171, %p172
      %p174 = scmp.ne.s32.totalorder %s165, %s166
      %p175 = scmp.eq.s32.totalorder %s33, 0
      %p176 = por %p174, %p175
      %p177 = scmp.ne.s32.totalorder %s165, %s166
      %p178 = scmp.eq.s32.totalorder %s34, 1
      %p179 = por %p177, %p178
      %p181 = scmp.ne.s32.totalorder %s166, %s180
      %p182 = scmp.eq.s32.totalorder %s34, 0
      %p183 = por %p181, %p182
      %s185 = sadd.s32 %s184, 1
      %p188 = scmp.eq.s32.totalorder %s28, 1
      %p189 = scmp.ne.s32.totalorder %s184, %s186
      %p190 = scmp.eq.s32.totalorder %s28, 0
      %p191 = por %p189, %p190
      %p192 = scmp.ne.s32.totalorder %s184, %s186
      %p193 = scmp.eq.s32.totalorder %s33, 1
      %p194 = por %p192, %p193
      %p195 = scmp.ne.s32.totalorder %s186, %s187
      %p196 = scmp.eq.s32.totalorder %s33, 0
      %p197 = por %p195, %p196
      %p198 = scmp.ne.s32.totalorder %s186, %s187
      %p199 = scmp.eq.s32.totalorder %s34, 1
      %p200 = por %p198, %p199
      %p202 = scmp.ne.s32.totalorder %s187, %s201
      %p203 = scmp.eq.s32.totalorder %s34, 0
      %p204 = por %p202, %p203
      %s206 = sadd.s32 %s205, 1
      %p209 = scmp.eq.s32.totalorder %s28, 1
      %p210 = scmp.ne.s32.totalorder %s205, %s207
      %p211 = scmp.eq.s32.totalorder %s28, 0
      %p212 = por %p210, %p211
      %p213 = scmp.ne.s32.totalorder %s205, %s207
      %p214 = scmp.eq.s32.totalorder %s33, 1
      %p215 = por %p213, %p214
      %p216 = scmp.ne.s32.totalorder %s207, %s208
      %p217 = scmp.eq.s32.totalorder %s33, 0
      %p218 = por %p216, %p217
      %p219 = scmp.ne.s32.totalorder %s207, %s208
      %p220 = scmp.eq.s32.totalorder %s34, 1
      %p221 = por %p219, %p220
      %p223 = scmp.ne.s32.totalorder %s208, %s222
      %p224 = scmp.eq.s32.totalorder %s34, 0
      %p225 = por %p223, %p224
      %s227 = sadd.s32 %s226, 1
      %p230 = scmp.eq.s32.totalorder %s28, 1
      %p231 = scmp.ne.s32.totalorder %s226, %s228
      %p232 = scmp.eq.s32.totalorder %s28, 0
      %p233 = por %p231, %p232
      %p234 = scmp.ne.s32.totalorder %s226, %s228
      %p235 = scmp.eq.s32.totalorder %s33, 1
      %p236 = por %p234, %p235
      %p237 = scmp.ne.s32.totalorder %s228, %s229
      %p238 = scmp.eq.s32.totalorder %s33, 0
      %p239 = por %p237, %p238
      %p240 = scmp.ne.s32.totalorder %s228, %s229
      %p241 = scmp.eq.s32.totalorder %s34, 1
      %p242 = por %p240, %p241
      %p244 = scmp.ne.s32.totalorder %s229, %s243
      %p245 = scmp.eq.s32.totalorder %s34, 0
      %p246 = por %p244, %p245
      %s248 = sadd.s32 %s247, 1
      %p251 = scmp.eq.s32.totalorder %s28, 1
      %p252 = scmp.ne.s32.totalorder %s247, %s249
      %p253 = scmp.eq.s32.totalorder %s28, 0
      %p254 = por %p252, %p253
      %p255 = scmp.ne.s32.totalorder %s247, %s249
      %p256 = scmp.eq.s32.totalorder %s33, 1
      %p257 = por %p255, %p256
      %p258 = scmp.ne.s32.totalorder %s249, %s250
      %p259 = scmp.eq.s32.totalorder %s33, 0
      %p260 = por %p258, %p259
      %p261 = scmp.ne.s32.totalorder %s249, %s250
      %p262 = scmp.eq.s32.totalorder %s34, 1
      %p263 = por %p261, %p262
      %p265 = scmp.ne.s32.totalorder %s250, %s264
      %p266 = scmp.eq.s32.totalorder %s34, 0
      %p267 = por %p265, %p266
      %s269 = sadd.s32 %s268, 1
      %p272 = scmp.eq.s32.totalorder %s28, 1
      %p273 = scmp.ne.s32.totalorder %s268, %s270
      %p274 = scmp.eq.s32.totalorder %s28, 0
      %p275 = por %p273, %p274
      %p276 = scmp.ne.s32.totalorder %s268, %s270
      %p277 = scmp.eq.s32.totalorder %s33, 1
      %p278 = por %p276, %p277
      %p279 = scmp.ne.s32.totalorder %s270, %s271
      %p280 = scmp.eq.s32.totalorder %s33, 0
      %p281 = por %p279, %p280
      %p282 = scmp.ne.s32.totalorder %s270, %s271
      %p283 = scmp.eq.s32.totalorder %s34, 1
      %p284 = por %p282, %p283
      %p286 = scmp.ne.s32.totalorder %s271, %s285
      %p287 = scmp.eq.s32.totalorder %s34, 0
      %p288 = por %p286, %p287
      %s289 = ssub.s32 %s35, %s47
      %s290 = ssub.s32 %s36, %s43
      %s291 = sor.u32 %s289, %s290
      %p292 = scmp.eq.s32.totalorder %s291, 0
      %s294 = sadd.s32 %s293, 1
      %s295 = scalar_select %p292, %s293, %s294
      %p298 = pneg %p292
      %p299 = scmp.eq.s32.totalorder %s28, 1
      %p300 = por %p298, %p299
      %p301 = scmp.ne.s32.totalorder %s293, %s296
      %p302 = scmp.eq.s32.totalorder %s28, 0
      %p303 = por %p301, %p302
      %p304 = scmp.ne.s32.totalorder %s293, %s296
      %p305 = scmp.eq.s32.totalorder %s33, 1
      %p306 = por %p304, %p305
      %p307 = scmp.ne.s32.totalorder %s296, %s297
      %p308 = scmp.eq.s32.totalorder %s33, 0
      %p309 = por %p307, %p308
      %p310 = scmp.ne.s32.totalorder %s296, %s297
      %p311 = scmp.eq.s32.totalorder %s34, 1
      %p312 = por %p310, %p311
      %p314 = scmp.ne.s32.totalorder %s297, %s313
      %p315 = scmp.eq.s32.totalorder %s34, 0
      %p316 = por %p314, %p315
      %p317 = scmp.le.s32.totalorder 1, %s28
      %p318 = scmp.lt.s32.totalorder %s28, 3
      %p319 = pnand %p317, %p318
      %p320 = pneg %p319
      // Predicated region
      $region9: #{tpu_custom_call.1} parent=5 // pred_check
        _
      $region10: #{tpu_custom_call.1} parent=5 // pred_check_branch
        %322 = sbr.rel (%p319) target = $region12
      $region11: #{tpu_custom_call.1} parent=5 // pred_region
        %s323 = ssub.s32 %s28, 1
        // Predicated region
        $region13: #{tpu_custom_call.1} parent=11 // pred_check
          %p324 = pneg %p113
        $region14: #{tpu_custom_call.1} parent=11 // pred_check_branch
          %326 = sbr.rel (%p324) target = $region16
        $region15: #{tpu_custom_call.1} parent=11 // pred_region
          _
        $region16: #{tpu_custom_call.1} parent=11 // pred_fallthru
          _
        // Predicated region
        $region17: #{tpu_custom_call.1} parent=11 // pred_check
          %p327 = pneg %p134
        $region18: #{tpu_custom_call.1} parent=11 // pred_check_branch
          %329 = sbr.rel (%p327) target = $region20
        $region19: #{tpu_custom_call.1} parent=11 // pred_region
          _
        $region20: #{tpu_custom_call.1} parent=11 // pred_fallthru
          _
        // Predicated region
        $region21: #{tpu_custom_call.1} parent=11 // pred_check
          %p330 = pneg %p155
        $region22: #{tpu_custom_call.1} parent=11 // pred_check_branch
          %332 = sbr.rel (%p330) target = $region24
        $region23: #{tpu_custom_call.1} parent=11 // pred_region
          %334 = vsyncadd [#allocation10], 0
          %s335 = sshll.u32 %s4, 4
          %s336 = int_to_ptr.hbm [resolvable:$true] %s335
          %s337 = sshll.u32 [#allocation11], 4
          %s338 = int_to_ptr.vmem [resolvable:$true] %s337
          %343 = dma.hbm_to_vmem [thread:$0]  %s336, 512, %s338, [#allocation10], 128, 128, 8
        $region24: #{tpu_custom_call.1} parent=11 // pred_fallthru
          _
        // Predicated region
        $region25: #{tpu_custom_call.1} parent=11 // pred_check
          %p344 = pneg %p176
        $region26: #{tpu_custom_call.1} parent=11 // pred_check_branch
          %346 = sbr.rel (%p344) target = $region28
        $region27: #{tpu_custom_call.1} parent=11 // pred_region
          _
        $region28: #{tpu_custom_call.1} parent=11 // pred_fallthru
          _
        // Predicated region
        $region29: #{tpu_custom_call.1} parent=11 // pred_check
          %p347 = pneg %p197
        $region30: #{tpu_custom_call.1} parent=11 // pred_check_branch
          %349 = sbr.rel (%p347) target = $region32
        $region31: #{tpu_custom_call.1} parent=11 // pred_region
          %351 = vsyncadd [#allocation13], 0
          %s352 = sshll.u32 %s6, 4
          %s353 = int_to_ptr.hbm [resolvable:$true] %s352
          %s354 = sshll.u32 [#allocation12], 4
          %s355 = int_to_ptr.vmem [resolvable:$true] %s354
          %360 = dma.hbm_to_vmem [thread:$0]  %s353, 512, %s355, [#allocation13], 128, 128, 8
        $region32: #{tpu_custom_call.1} parent=11 // pred_fallthru
          _
        // Predicated region
        $region33: #{tpu_custom_call.1} parent=11 // pred_check
          %p361 = pneg %p218
        $region34: #{tpu_custom_call.1} parent=11 // pred_check_branch
          %363 = sbr.rel (%p361) target = $region36
        $region35: #{tpu_custom_call.1} parent=11 // pred_region
          %365 = vsyncadd [#allocation13], 0
          %s366 = sshll.u32 %s7, 4
          %s367 = int_to_ptr.hbm [resolvable:$true] %s366
          %s368 = sshll.u32 [#allocation14], 4
          %s369 = int_to_ptr.vmem [resolvable:$true] %s368
          %374 = dma.hbm_to_vmem [thread:$0]  %s367, 512, %s369, [#allocation13], 128, 128, 8
        $region36: #{tpu_custom_call.1} parent=11 // pred_fallthru
          _
        // Predicated region
        $region37: #{tpu_custom_call.1} parent=11 // pred_check
          %p375 = pneg %p239
        $region38: #{tpu_custom_call.1} parent=11 // pred_check_branch
          %377 = sbr.rel (%p375) target = $region40
        $region39: #{tpu_custom_call.1} parent=11 // pred_region
          _
        $region40: #{tpu_custom_call.1} parent=11 // pred_fallthru
          _
        // Predicated region
        $region41: #{tpu_custom_call.1} parent=11 // pred_check
          %p378 = pneg %p260
        $region42: #{tpu_custom_call.1} parent=11 // pred_check_branch
          %380 = sbr.rel (%p378) target = $region44
        $region43: #{tpu_custom_call.1} parent=11 // pred_region
          %382 = vsyncadd [#allocation16], 0
          %s383 = sshll.u32 %s9, 4
          %s384 = int_to_ptr.hbm [resolvable:$true] %s383
          %s385 = sshll.u32 [#allocation15], 4
          %s386 = int_to_ptr.vmem [resolvable:$true] %s385
          %391 = dma.hbm_to_vmem [thread:$0]  %s384, 512, %s386, [#allocation16], 128, 128, 8
        $region44: #{tpu_custom_call.1} parent=11 // pred_fallthru
          _
        // Predicated region
        $region45: #{tpu_custom_call.1} parent=11 // pred_check
          %p392 = pneg %p281
        $region46: #{tpu_custom_call.1} parent=11 // pred_check_branch
          %394 = sbr.rel (%p392) target = $region48
        $region47: #{tpu_custom_call.1} parent=11 // pred_region
          _
        $region48: #{tpu_custom_call.1} parent=11 // pred_fallthru
          _
      $region12: #{tpu_custom_call.1} parent=5 // pred_fallthru
        _
      %p395 = scmp.lt.s32.totalorder %s28, 2
      // Predicated region
      $region49: #{tpu_custom_call.1} parent=5 // pred_check
        %p396 = pneg %p395
      $region50: #{tpu_custom_call.1} parent=5 // pred_check_branch
        %398 = sbr.rel (%p396) target = $region52
      $region51: #{tpu_custom_call.1} parent=5 // pred_region
        // Predicated region
        $region53: #{tpu_custom_call.1} parent=51 // pred_check
          %p399 = pneg %p60
        $region54: #{tpu_custom_call.1} parent=51 // pred_check_branch
          %401 = sbr.rel (%p399) target = $region56
        $region55: #{tpu_custom_call.1} parent=51 // pred_region
          %s402 = sand.u32 %s50, 1
          %s403 = scalar_lea.sflag [#allocation7], %s402
          %s404 = sand.u32 %s50, 1
          %s405 = smul.addr %s404, 8
          %s406 = scalar_lea.vmem [#allocation6], %s405
          %408 = vsyncadd %s403, 0
          %s409 = smul.addr %s35, 8
          %s410 = scalar_lea.hbm %s0, %s409
          %s412 = sshll.u32 %s410, 4
          %s413 = int_to_ptr.hbm [resolvable:$true] %s412
          %s414 = sshll.u32 %s406, 4
          %s415 = int_to_ptr.vmem [resolvable:$true] %s414
          %417 = dma.hbm_to_vmem [thread:$0]  %s413, 128, %s415, %s403
        $region56: #{tpu_custom_call.1} parent=51 // pred_fallthru
          _
        // Predicated region
        $region57: #{tpu_custom_call.1} parent=51 // pred_check
          %p418 = pneg %p86
        $region58: #{tpu_custom_call.1} parent=51 // pred_check_branch
          %420 = sbr.rel (%p418) target = $region60
        $region59: #{tpu_custom_call.1} parent=51 // pred_region
          %s421 = sand.u32 %s28, 1
          %s422 = scalar_lea.sflag [#allocation10], %s421
          %s423 = sand.u32 %s76, 1
          %s424 = scalar_lea.vmem [#allocation9], %s423
          %426 = vsyncadd %s422, 0
          %s427 = scalar_lea.hbm %s1, %s35
          %s429 = sshll.u32 %s427, 4
          %s430 = int_to_ptr.hbm [resolvable:$true] %s429
          %s431 = sshll.u32 %s424, 4
          %s432 = int_to_ptr.vmem [resolvable:$true] %s431
          %434 = dma.hbm_to_vmem [thread:$0]  %s430, 16, %s432, %s422
        $region60: #{tpu_custom_call.1} parent=51 // pred_fallthru
          _
      $region52: #{tpu_custom_call.1} parent=5 // pred_fallthru
        _
      %p435 = scmp.le.s32.totalorder 1, %s28
      %p436 = scmp.lt.s32.totalorder %s28, 3
      %p437 = pnand %p435, %p436
      %p438 = pneg %p437
      // Predicated region
      $region61: #{tpu_custom_call.1} parent=5 // pred_check
        _
      $region62: #{tpu_custom_call.1} parent=5 // pred_check_branch
        %440 = sbr.rel (%p437) target = $region64
      $region63: #{tpu_custom_call.1} parent=5 // pred_region
        %s441 = ssub.s32 %s28, 1
        %s442 = sand.u32 %s53, 1
        %s443 = scalar_lea.sflag [#allocation7], %s442
        %s444 = sand.u32 %s53, 1
        %s445 = smul.addr %s444, 8
        %s446 = scalar_lea.vmem [#allocation6], %s445
        // Predicated region
        $region65: #{tpu_custom_call.1} parent=63 // pred_check
          %p447 = pneg %p66
        $region66: #{tpu_custom_call.1} parent=63 // pred_check_branch
          %449 = sbr.rel (%p447) target = $region68
        $region67: #{tpu_custom_call.1} parent=63 // pred_region
          %451 = dma.done %s443, 128
        $region68: #{tpu_custom_call.1} parent=63 // pred_fallthru
          _
        %s452 = sand.u32 %s33, 1
        %s453 = scalar_lea.sflag [#allocation10], %s452
        %s454 = sand.u32 %s79, 1
        %s455 = scalar_lea.vmem [#allocation9], %s454
        // Predicated region
        $region69: #{tpu_custom_call.1} parent=63 // pred_check
          %p456 = pneg %p92
        $region70: #{tpu_custom_call.1} parent=63 // pred_check_branch
          %458 = sbr.rel (%p456) target = $region72
        $region71: #{tpu_custom_call.1} parent=63 // pred_region
          %460 = dma.done %s453, 16
        $region72: #{tpu_custom_call.1} parent=63 // pred_fallthru
          _
        // Predicated region
        $region73: #{tpu_custom_call.1} parent=63 // pred_check
          %p461 = pneg %p155
        $region74: #{tpu_custom_call.1} parent=63 // pred_check_branch
          %463 = sbr.rel (%p461) target = $region76
        $region75: #{tpu_custom_call.1} parent=63 // pred_region
          %465 = dma.done [#allocation10], 512
        $region76: #{tpu_custom_call.1} parent=63 // pred_fallthru
          _
        // Predicated region
        $region77: #{tpu_custom_call.1} parent=63 // pred_check
          %p466 = pneg %p197
        $region78: #{tpu_custom_call.1} parent=63 // pred_check_branch
          %468 = sbr.rel (%p466) target = $region80
        $region79: #{tpu_custom_call.1} parent=63 // pred_region
          %470 = dma.done [#allocation13], 512
        $region80: #{tpu_custom_call.1} parent=63 // pred_fallthru
          _
        // Predicated region
        $region81: #{tpu_custom_call.1} parent=63 // pred_check
          %p471 = pneg %p218
        $region82: #{tpu_custom_call.1} parent=63 // pred_check_branch
          %473 = sbr.rel (%p471) target = $region84
        $region83: #{tpu_custom_call.1} parent=63 // pred_region
          %475 = dma.done [#allocation13], 512
        $region84: #{tpu_custom_call.1} parent=63 // pred_fallthru
          _
        // Predicated region
        $region85: #{tpu_custom_call.1} parent=63 // pred_check
          %p476 = pneg %p260
        $region86: #{tpu_custom_call.1} parent=63 // pred_check_branch
          %478 = sbr.rel (%p476) target = $region88
        $region87: #{tpu_custom_call.1} parent=63 // pred_region
          %480 = dma.done [#allocation16], 512
        $region88: #{tpu_custom_call.1} parent=63 // pred_fallthru
          _
        %s481 = sand.u32 %s53, 1
        %s482 = scalar_lea.sflag [#allocation7], %s481
        %s483 = sand.u32 %s53, 1
        %s484 = smul.addr %s483, 8
        %s485 = scalar_lea.vmem [#allocation6], %s484
        %p486 = pneg %p66
        %p487 = pneg %p63
        %s488 = sand.u32 %s33, 1
        %s489 = scalar_lea.sflag [#allocation10], %s488
        %s490 = sand.u32 %s79, 1
        %s491 = scalar_lea.vmem [#allocation9], %s490
        %p492 = pneg %p92
        %p493 = pneg %p89
        %p494 = pneg %p113
        %p495 = pneg %p110
        %p496 = pneg %p134
        %p497 = pneg %p131
        %p498 = pneg %p155
        %p499 = pneg %p152
        %p500 = pneg %p176
        %p501 = pneg %p173
        %p502 = pneg %p197
        %p503 = pneg %p194
        %p504 = pneg %p218
        %p505 = pneg %p215
        %p506 = pneg %p239
        %p507 = pneg %p236
        %p508 = pneg %p260
        %p509 = pneg %p257
        %p510 = pneg %p281
        %p511 = pneg %p278
        %p512 = pneg %p309
        %p513 = pneg %p306
        %s514 = sand.u32 %s296, 1
        %s515 = scalar_lea.sflag [#allocation8], %s514
        %s516 = sand.u32 %s296, 1
        %s517 = smul.addr %s516, 8
        %s518 = scalar_lea.vmem [#allocation17], %s517
        %p519 = scmp.eq.s32.totalorder %s38, 0
        // Predicated region
        $region89: #{tpu_custom_call.1} parent=63 // pred_check
          %p520 = pneg %p519
        $region90: #{tpu_custom_call.1} parent=63 // pred_check_branch
          %522 = sbr.rel (%p520) target = $region92
        $region91: #{tpu_custom_call.1} parent=63 // pred_region
          %v523 = vld [vmem:[%s446] sm:$0xff]
          %v524 = vld [vmem:[%s2] sm:$0x1]
          %v525 = vld [vmem:[%s3] sm:$0x1]
          %vm526 = vcmask 261120
          %v527 = vsel %vm526, %v523, 0.0
          %528 = vadd.xlane.f32.xlu0 %v527
          %v529 = vpop.xlane.xlu0 %528
          %v530 = vrcp.pop 32.0
          %v531 = vmul.f32 32.0, %v530
          %v532 = vsub.f32 1.0, %v531
          %v533 = vmul.f32 %v530, %v532
          %v534 = vadd.f32 %v530, %v533
          %vm535 = vweird.f32 %v530
          %v536 = vsel %vm535, %v530, %v534
          %v537 = vmul.f32 %v529, %v536
          %v538 = vsub.f32 %v523, %v537
          %v539 = vmul.f32 %v538, %v538
          %v540 = vsel %vm526, %v539, 0.0
          %541 = vadd.xlane.f32.xlu0 %v540
          %v542 = vpop.xlane.xlu0 %541
          %v543 = vmul.f32 %v542, %v536
          %v544 = vadd.f32 %v543, 1e-05
          %v545 = vrsqrt.pop %v544
          %v546 = vmul.f32 %v545, %v544
          %v547 = vmul.f32 %v546, %v545
          %v548 = vmul.f32 0.5, %v547
          %v549 = vsub.f32 1.5, %v548
          %v550 = vmul.f32 %v545, %v549
          %vm551 = vweird.f32 %v544
          %vm552 = vweird.f32 %v545
          %vm553 = vmor %vm551, %vm552
          %v554 = vsel %vm553, %v545, %v550
          %v555 = vmul.f32 %v538, %v554
          %v557 = vperm.slane %v524, 0
          %v559 = vmul.f32 %v555, %v557
          %v561 = vperm.slane %v525, 0
          %v563 = vadd.f32 %v559, %v561
          %v564 = vld [vmem:[#allocation12] sm:$0xff]
          %v565 = vld [vmem:[#allocation12 + $0x8] sm:$0xff]
          %v566 = vld [vmem:[#allocation12 + $0x10] sm:$0xff]
          %v567 = vld [vmem:[#allocation12 + $0x18] sm:$0xff]
          %v569 = vsel %vm526, %v563, 0
          %571 = vmatpush.msra.mxu0 0.0
          %572 = vmatpush.msra.mxu0 0.0
          %573 = vmatpush.msra.mxu0 0.0
          %574 = vmatpush.msra.mxu0 0.0
          %575 = vmatpush.msra.mxu0 0.0
          %576 = vmatpush.msra.mxu0 0.0
          %577 = vmatpush.msra.mxu0 0.0
          %578 = vmatpush.msra.mxu0 0.0
          %579 = vmatpush.msra.mxu0 0.0
          %580 = vmatpush.msra.mxu0 0.0
          %581 = vmatpush.msra.mxu0 0.0
          %582 = vmatpush.msra.mxu0 0.0
          %583 = vmatpush.msra.mxu0 %v567
          %584 = vmatpush.msra.mxu0 %v566
          %585 = vmatpush.msra.mxu0 %v565
          %586 = vmatpush.msra.mxu0 %v564
          %587 = vmatmul.f32.gmra.mxu0 %v569
          %v588 = vpop.f32.mrf.mxu0
          %v589 = vadd.f32 0.0, %v588
          %590 = vdwg.mxu0
          %591 = vst.msk [vmem:[#allocation2] sm:$0xff] %vm526, %v589
          %v592 = vld [vmem:[#allocation14] sm:$0xff]
          %v593 = vld [vmem:[#allocation14 + $0x8] sm:$0xff]
          %v594 = vld [vmem:[#allocation14 + $0x10] sm:$0xff]
          %v595 = vld [vmem:[#allocation14 + $0x18] sm:$0xff]
          %v596 = vld [vmem:[%s8] sm:$0x1]
          %v598 = vperm.slane %v596, 0
          %600 = vmatpush.msra.mxu0 0.0
          %601 = vmatpush.msra.mxu0 0.0
          %602 = vmatpush.msra.mxu0 0.0
          %603 = vmatpush.msra.mxu0 0.0
          %604 = vmatpush.msra.mxu0 0.0
          %605 = vmatpush.msra.mxu0 0.0
          %606 = vmatpush.msra.mxu0 0.0
          %607 = vmatpush.msra.mxu0 0.0
          %608 = vmatpush.msra.mxu0 0.0
          %609 = vmatpush.msra.mxu0 0.0
          %610 = vmatpush.msra.mxu0 0.0
          %611 = vmatpush.msra.mxu0 0.0
          %612 = vmatpush.msra.mxu0 %v595
          %613 = vmatpush.msra.mxu0 %v594
          %614 = vmatpush.msra.mxu0 %v593
          %615 = vmatpush.msra.mxu0 %v592
          %616 = vmatmul.f32.gmra.mxu0 %v569
          %v617 = vpop.f32.mrf.mxu0
          %v618 = vadd.f32 %v598, %v617
          %619 = vdwg.mxu0
          %620 = vst.msk [vmem:[#allocation3] sm:$0xff] %vm526, %v618
        $region92: #{tpu_custom_call.1} parent=63 // pred_fallthru
          _
        %s621 = smul.u32 %s38, 8
        %s622 = scalar_lea.vmem %s446, %s621 [#allocation6]
        %v623 = vld [vmem:[%s622] sm:$0xff]
        %v624 = vld [vmem:[%s2] sm:$0x1]
        %v625 = vld [vmem:[%s3] sm:$0x1]
        %vm626 = vcmask 261120
        %v627 = vsel %vm626, %v623, 0.0
        %628 = vadd.xlane.f32.xlu0 %v627
        %v629 = vpop.xlane.xlu0 %628
        %v630 = vrcp.pop 32.0
        %v631 = vmul.f32 32.0, %v630
        %v632 = vsub.f32 1.0, %v631
        %v633 = vmul.f32 %v630, %v632
        %v634 = vadd.f32 %v630, %v633
        %vm635 = vweird.f32 %v630
        %v636 = vsel %vm635, %v630, %v634
        %v637 = vmul.f32 %v629, %v636
        %v638 = vsub.f32 %v623, %v637
        %v639 = vmul.f32 %v638, %v638
        %v640 = vsel %vm626, %v639, 0.0
        %641 = vadd.xlane.f32.xlu0 %v640
        %v642 = vpop.xlane.xlu0 %641
        %v643 = vmul.f32 %v642, %v636
        %v644 = vadd.f32 %v643, 1e-05
        %v645 = vrsqrt.pop %v644
        %v646 = vmul.f32 %v645, %v644
        %v647 = vmul.f32 %v646, %v645
        %v648 = vmul.f32 0.5, %v647
        %v649 = vsub.f32 1.5, %v648
        %v650 = vmul.f32 %v645, %v649
        %vm651 = vweird.f32 %v644
        %vm652 = vweird.f32 %v645
        %vm653 = vmor %vm651, %vm652
        %v654 = vsel %vm653, %v645, %v650
        %v655 = vmul.f32 %v638, %v654
        %v657 = vperm.slane %v624, 0
        %v659 = vmul.f32 %v655, %v657
        %v661 = vperm.slane %v625, 0
        %v663 = vadd.f32 %v659, %v661
        %v664 = vld [vmem:[#allocation11] sm:$0xff]
        %v665 = vld [vmem:[#allocation11 + $0x8] sm:$0xff]
        %v666 = vld [vmem:[#allocation11 + $0x10] sm:$0xff]
        %v667 = vld [vmem:[#allocation11 + $0x18] sm:$0xff]
        %v668 = vld [vmem:[%s5] sm:$0x1]
        %v670 = vperm.slane %v668, 0
        %v673 = vsel %vm626, %v663, 0
        %675 = vmatpush.msra.mxu0 0.0
        %676 = vmatpush.msra.mxu0 0.0
        %677 = vmatpush.msra.mxu0 0.0
        %678 = vmatpush.msra.mxu0 0.0
        %679 = vmatpush.msra.mxu0 0.0
        %680 = vmatpush.msra.mxu0 0.0
        %681 = vmatpush.msra.mxu0 0.0
        %682 = vmatpush.msra.mxu0 0.0
        %683 = vmatpush.msra.mxu0 0.0
        %684 = vmatpush.msra.mxu0 0.0
        %685 = vmatpush.msra.mxu0 0.0
        %686 = vmatpush.msra.mxu0 0.0
        %687 = vmatpush.msra.mxu0 %v667
        %688 = vmatpush.msra.mxu0 %v666
        %689 = vmatpush.msra.mxu0 %v665
        %690 = vmatpush.msra.mxu0 %v664
        %691 = vmatmul.f32.gmra.mxu0 %v673
        %v692 = vpop.f32.mrf.mxu0
        %v693 = vadd.f32 %v670, %v692
        %694 = vdwg.mxu0
        %v695 = vmul.f32 %v693, 0.35355338
        %696 = vst.msk [vmem:[#allocation4] sm:$0xff] %vm626, %v695
        %v697 = vld [vmem:[%s455] sm:$0x1]
        %v698 = vld [vmem:[#allocation4] sm:$0xff]
        %v699 = vld [vmem:[#allocation2] sm:$0xff]
        %v701 = vperm.slane %v697, 0
        %vm703 = vcmask 64512
        %v705 = vsel %vm703, %v698, 0
        %v708 = vsel %vm703, %v699, 0
        %710 = vmatpush.xpose.msra.mxu0 0.0
        %711 = vmatpush.xpose.msra.mxu0 0.0
        %712 = vmatpush.xpose.msra.mxu0 0.0
        %713 = vmatpush.xpose.msra.mxu0 0.0
        %714 = vmatpush.xpose.msra.mxu0 0.0
        %715 = vmatpush.xpose.msra.mxu0 0.0
        %716 = vmatpush.xpose.msra.mxu0 0.0
        %717 = vmatpush.xpose.msra.mxu0 0.0
        %718 = vmatpush.xpose.msra.mxu0 0.0
        %719 = vmatpush.xpose.msra.mxu0 0.0
        %720 = vmatpush.xpose.msra.mxu0 0.0
        %721 = vmatpush.xpose.msra.mxu0 0.0
        %722 = vmatpush.xpose.msra.mxu0 0.0
        %723 = vmatpush.xpose.msra.mxu0 0.0
        %724 = vmatpush.xpose.msra.mxu0 0.0
        %725 = vmatpush.xpose.msra.mxu0 %v708
        %726 = vmatmul.f32.gmra.mxu0 %v705
        %v727 = vpop.f32.mrf.mxu0
        %v728 = vadd.f32 %v701, %v727
        %729 = vdwg.mxu0
        %v730 = vsel %vm703, %v728, -inf
        %731 = vmax.xlane.f32.xlu0 %v730
        %v732 = vpop.xlane.xlu0 %731
        %v733 = vsub.f32 %v728, %v732
        %v734 = vmul.f32 %v733, 1.442695
        %v735 = vpow.pop %v734
        %v736 = vsel %vm703, %v735, 0.0
        %737 = vadd.xlane.f32.xlu0 %v736
        %v738 = vpop.xlane.xlu0 %737
        %v739 = vrcp.pop %v738
        %v740 = vmul.f32 %v738, %v739
        %v741 = vsub.f32 1.0, %v740
        %v742 = vmul.f32 %v739, %v741
        %v743 = vadd.f32 %v739, %v742
        %vm744 = vweird.f32 %v738
        %vm745 = vweird.f32 %v739
        %vm746 = vmor %vm744, %vm745
        %v747 = vsel %vm746, %v739, %v743
        %v748 = vand.u32 2147483647, %v738
        %vm749 = vcmp.eq.f32.partialorder %v748, 8.507059e+37
        %v750 = vand.u32 %v738, 2147483648
        %v751 = vor.u32 1.1754944e-38, %v750
        %v752 = vsel %vm749, %v751, %v747
        %v753 = vmul.f32 %v735, %v752
        %v754 = vld [vmem:[#allocation3] sm:$0xff]
        %v756 = vsel %vm703, %v753, 0
        %758 = vmatpush.msra.mxu0 0.0
        %759 = vmatpush.msra.mxu0 0.0
        %760 = vmatpush.msra.mxu0 0.0
        %761 = vmatpush.msra.mxu0 0.0
        %762 = vmatpush.msra.mxu0 0.0
        %763 = vmatpush.msra.mxu0 0.0
        %764 = vmatpush.msra.mxu0 0.0
        %765 = vmatpush.msra.mxu0 0.0
        %766 = vmatpush.msra.mxu0 0.0
        %767 = vmatpush.msra.mxu0 0.0
        %768 = vmatpush.msra.mxu0 0.0
        %769 = vmatpush.msra.mxu0 0.0
        %770 = vmatpush.msra.mxu0 0.0
        %771 = vmatpush.msra.mxu0 0.0
        %772 = vmatpush.msra.mxu0 0.0
        %773 = vmatpush.msra.mxu0 %v754
        %774 = vmatmul.f32.gmra.mxu0 %v756
        %v775 = vpop.f32.mrf.mxu0
        %v776 = vadd.f32 0.0, %v775
        %777 = vdwg.mxu0
        %778 = vst.msk [vmem:[#allocation5] sm:$0xff] %vm703, %v776
        %v779 = vld [vmem:[#allocation4] sm:$0xff]
        %v780 = vld [vmem:[#allocation2] sm:$0xff]
        %782 = vrot.lane.b32.xlu0 %v779, 120
        %v783 = vpop.permute.xlu0 %782
        %785 = vrot.lane.b32.xlu0 %v780, 120
        %v786 = vpop.permute.xlu0 %785
        %v787 = vsel %vm703, %v783, 0
        %v789 = vsel %vm703, %v786, 0
        %791 = vmatpush.xpose.msra.mxu0 0.0
        %792 = vmatpush.xpose.msra.mxu0 0.0
        %793 = vmatpush.xpose.msra.mxu0 0.0
        %794 = vmatpush.xpose.msra.mxu0 0.0
        %795 = vmatpush.xpose.msra.mxu0 0.0
        %796 = vmatpush.xpose.msra.mxu0 0.0
        %797 = vmatpush.xpose.msra.mxu0 0.0
        %798 = vmatpush.xpose.msra.mxu0 0.0
        %799 = vmatpush.xpose.msra.mxu0 0.0
        %800 = vmatpush.xpose.msra.mxu0 0.0
        %801 = vmatpush.xpose.msra.mxu0 0.0
        %802 = vmatpush.xpose.msra.mxu0 0.0
        %803 = vmatpush.xpose.msra.mxu0 0.0
        %804 = vmatpush.xpose.msra.mxu0 0.0
        %805 = vmatpush.xpose.msra.mxu0 0.0
        %806 = vmatpush.xpose.msra.mxu0 %v789
        %807 = vmatmul.f32.gmra.mxu0 %v787
        %v808 = vpop.f32.mrf.mxu0
        %v809 = vadd.f32 %v701, %v808
        %810 = vdwg.mxu0
        %v811 = vsel %vm703, %v809, -inf
        %812 = vmax.xlane.f32.xlu0 %v811
        %v813 = vpop.xlane.xlu0 %812
        %v814 = vsub.f32 %v809, %v813
        %v815 = vmul.f32 %v814, 1.442695
        %v816 = vpow.pop %v815
        %v817 = vsel %vm703, %v816, 0.0
        %818 = vadd.xlane.f32.xlu0 %v817
        %v819 = vpop.xlane.xlu0 %818
        %v820 = vrcp.pop %v819
        %v821 = vmul.f32 %v819, %v820
        %v822 = vsub.f32 1.0, %v821
        %v823 = vmul.f32 %v820, %v822
        %v824 = vadd.f32 %v820, %v823
        %vm825 = vweird.f32 %v819
        %vm826 = vweird.f32 %v820
        %vm827 = vmor %vm825, %vm826
        %v828 = vsel %vm827, %v820, %v824
        %v829 = vand.u32 2147483647, %v819
        %vm830 = vcmp.eq.f32.partialorder %v829, 8.507059e+37
        %v831 = vand.u32 %v819, 2147483648
        %v832 = vor.u32 1.1754944e-38, %v831
        %v833 = vsel %vm830, %v832, %v828
        %v834 = vmul.f32 %v816, %v833
        %v835 = vld [vmem:[#allocation3] sm:$0xff]
        %837 = vrot.lane.b32.xlu0 %v835, 120
        %v838 = vpop.permute.xlu0 %837
        %v841 = vsel %vm703, %v834, 0
        %843 = vmatpush.msra.mxu0 0.0
        %844 = vmatpush.msra.mxu0 0.0
        %845 = vmatpush.msra.mxu0 0.0
        %846 = vmatpush.msra.mxu0 0.0
        %847 = vmatpush.msra.mxu0 0.0
        %848 = vmatpush.msra.mxu0 0.0
        %849 = vmatpush.msra.mxu0 0.0
        %850 = vmatpush.msra.mxu0 0.0
        %851 = vmatpush.msra.mxu0 0.0
        %852 = vmatpush.msra.mxu0 0.0
        %853 = vmatpush.msra.mxu0 0.0
        %854 = vmatpush.msra.mxu0 0.0
        %855 = vmatpush.msra.mxu0 0.0
        %856 = vmatpush.msra.mxu0 0.0
        %857 = vmatpush.msra.mxu0 0.0
        %858 = vmatpush.msra.mxu0 %v838
        %859 = vmatmul.f32.gmra.mxu0 %v841
        %v860 = vpop.f32.mrf.mxu0
        %v861 = vadd.f32 0.0, %v860
        %862 = vdwg.mxu0
        %864 = vrot.lane.b32.xlu0 %v861, 8
        %v865 = vpop.permute.xlu0 %864
        %vm867 = vcmask 130112
        %868 = vst.msk [vmem:[#allocation5] sm:$0xff] %vm867, %v865
        %v869 = vld [vmem:[#allocation4] sm:$0xff]
        %v870 = vld [vmem:[#allocation2] sm:$0xff]
        %872 = vrot.lane.b32.xlu0 %v869, 112
        %v873 = vpop.permute.xlu0 %872
        %875 = vrot.lane.b32.xlu0 %v870, 112
        %v876 = vpop.permute.xlu0 %875
        %v877 = vsel %vm703, %v873, 0
        %v879 = vsel %vm703, %v876, 0
        %881 = vmatpush.xpose.msra.mxu0 0.0
        %882 = vmatpush.xpose.msra.mxu0 0.0
        %883 = vmatpush.xpose.msra.mxu0 0.0
        %884 = vmatpush.xpose.msra.mxu0 0.0
        %885 = vmatpush.xpose.msra.mxu0 0.0
        %886 = vmatpush.xpose.msra.mxu0 0.0
        %887 = vmatpush.xpose.msra.mxu0 0.0
        %888 = vmatpush.xpose.msra.mxu0 0.0
        %889 = vmatpush.xpose.msra.mxu0 0.0
        %890 = vmatpush.xpose.msra.mxu0 0.0
        %891 = vmatpush.xpose.msra.mxu0 0.0
        %892 = vmatpush.xpose.msra.mxu0 0.0
        %893 = vmatpush.xpose.msra.mxu0 0.0
        %894 = vmatpush.xpose.msra.mxu0 0.0
        %895 = vmatpush.xpose.msra.mxu0 0.0
        %896 = vmatpush.xpose.msra.mxu0 %v879
        %897 = vmatmul.f32.gmra.mxu0 %v877
        %v898 = vpop.f32.mrf.mxu0
        %v899 = vadd.f32 %v701, %v898
        %900 = vdwg.mxu0
        %v901 = vsel %vm703, %v899, -inf
        %902 = vmax.xlane.f32.xlu0 %v901
        %v903 = vpop.xlane.xlu0 %902
        %v904 = vsub.f32 %v899, %v903
        %v905 = vmul.f32 %v904, 1.442695
        %v906 = vpow.pop %v905
        %v907 = vsel %vm703, %v906, 0.0
        %908 = vadd.xlane.f32.xlu0 %v907
        %v909 = vpop.xlane.xlu0 %908
        %v910 = vrcp.pop %v909
        %v911 = vmul.f32 %v909, %v910
        %v912 = vsub.f32 1.0, %v911
        %v913 = vmul.f32 %v910, %v912
        %v914 = vadd.f32 %v910, %v913
        %vm915 = vweird.f32 %v909
        %vm916 = vweird.f32 %v910
        %vm917 = vmor %vm915, %vm916
        %v918 = vsel %vm917, %v910, %v914
        %v919 = vand.u32 2147483647, %v909
        %vm920 = vcmp.eq.f32.partialorder %v919, 8.507059e+37
        %v921 = vand.u32 %v909, 2147483648
        %v922 = vor.u32 1.1754944e-38, %v921
        %v923 = vsel %vm920, %v922, %v918
        %v924 = vmul.f32 %v906, %v923
        %v925 = vld [vmem:[#allocation3] sm:$0xff]
        %927 = vrot.lane.b32.xlu0 %v925, 112
        %v928 = vpop.permute.xlu0 %927
        %v931 = vsel %vm703, %v924, 0
        %933 = vmatpush.msra.mxu0 0.0
        %934 = vmatpush.msra.mxu0 0.0
        %935 = vmatpush.msra.mxu0 0.0
        %936 = vmatpush.msra.mxu0 0.0
        %937 = vmatpush.msra.mxu0 0.0
        %938 = vmatpush.msra.mxu0 0.0
        %939 = vmatpush.msra.mxu0 0.0
        %940 = vmatpush.msra.mxu0 0.0
        %941 = vmatpush.msra.mxu0 0.0
        %942 = vmatpush.msra.mxu0 0.0
        %943 = vmatpush.msra.mxu0 0.0
        %944 = vmatpush.msra.mxu0 0.0
        %945 = vmatpush.msra.mxu0 0.0
        %946 = vmatpush.msra.mxu0 0.0
        %947 = vmatpush.msra.mxu0 0.0
        %948 = vmatpush.msra.mxu0 %v928
        %949 = vmatmul.f32.gmra.mxu0 %v931
        %v950 = vpop.f32.mrf.mxu0
        %v951 = vadd.f32 0.0, %v950
        %952 = vdwg.mxu0
        %954 = vrot.lane.b32.xlu0 %v951, 16
        %v955 = vpop.permute.xlu0 %954
        %vm957 = vcmask 195712
        %958 = vst.msk [vmem:[#allocation5] sm:$0xff] %vm957, %v955
        %v959 = vld [vmem:[#allocation4] sm:$0xff]
        %v960 = vld [vmem:[#allocation2] sm:$0xff]
        %962 = vrot.lane.b32.xlu0 %v959, 104
        %v963 = vpop.permute.xlu0 %962
        %965 = vrot.lane.b32.xlu0 %v960, 104
        %v966 = vpop.permute.xlu0 %965
        %v967 = vsel %vm703, %v963, 0
        %v969 = vsel %vm703, %v966, 0
        %971 = vmatpush.xpose.msra.mxu0 0.0
        %972 = vmatpush.xpose.msra.mxu0 0.0
        %973 = vmatpush.xpose.msra.mxu0 0.0
        %974 = vmatpush.xpose.msra.mxu0 0.0
        %975 = vmatpush.xpose.msra.mxu0 0.0
        %976 = vmatpush.xpose.msra.mxu0 0.0
        %977 = vmatpush.xpose.msra.mxu0 0.0
        %978 = vmatpush.xpose.msra.mxu0 0.0
        %979 = vmatpush.xpose.msra.mxu0 0.0
        %980 = vmatpush.xpose.msra.mxu0 0.0
        %981 = vmatpush.xpose.msra.mxu0 0.0
        %982 = vmatpush.xpose.msra.mxu0 0.0
        %983 = vmatpush.xpose.msra.mxu0 0.0
        %984 = vmatpush.xpose.msra.mxu0 0.0
        %985 = vmatpush.xpose.msra.mxu0 0.0
        %986 = vmatpush.xpose.msra.mxu0 %v969
        %987 = vmatmul.f32.gmra.mxu0 %v967
        %v988 = vpop.f32.mrf.mxu0
        %v989 = vadd.f32 %v701, %v988
        %990 = vdwg.mxu0
        %v991 = vsel %vm703, %v989, -inf
        %992 = vmax.xlane.f32.xlu0 %v991
        %v993 = vpop.xlane.xlu0 %992
        %v994 = vsub.f32 %v989, %v993
        %v995 = vmul.f32 %v994, 1.442695
        %v996 = vpow.pop %v995
        %v997 = vsel %vm703, %v996, 0.0
        %998 = vadd.xlane.f32.xlu0 %v997
        %v999 = vpop.xlane.xlu0 %998
        %v1000 = vrcp.pop %v999
        %v1001 = vmul.f32 %v999, %v1000
        %v1002 = vsub.f32 1.0, %v1001
        %v1003 = vmul.f32 %v1000, %v1002
        %v1004 = vadd.f32 %v1000, %v1003
        %vm1005 = vweird.f32 %v999
        %vm1006 = vweird.f32 %v1000
        %vm1007 = vmor %vm1005, %vm1006
        %v1008 = vsel %vm1007, %v1000, %v1004
        %v1009 = vand.u32 2147483647, %v999
        %vm1010 = vcmp.eq.f32.partialorder %v1009, 8.507059e+37
        %v1011 = vand.u32 %v999, 2147483648
        %v1012 = vor.u32 1.1754944e-38, %v1011
        %v1013 = vsel %vm1010, %v1012, %v1008
        %v1014 = vmul.f32 %v996, %v1013
        %v1015 = vld [vmem:[#allocation3] sm:$0xff]
        %1017 = vrot.lane.b32.xlu0 %v1015, 104
        %v1018 = vpop.permute.xlu0 %1017
        %v1021 = vsel %vm703, %v1014, 0
        %1023 = vmatpush.msra.mxu0 0.0
        %1024 = vmatpush.msra.mxu0 0.0
        %1025 = vmatpush.msra.mxu0 0.0
        %1026 = vmatpush.msra.mxu0 0.0
        %1027 = vmatpush.msra.mxu0 0.0
        %1028 = vmatpush.msra.mxu0 0.0
        %1029 = vmatpush.msra.mxu0 0.0
        %1030 = vmatpush.msra.mxu0 0.0
        %1031 = vmatpush.msra.mxu0 0.0
        %1032 = vmatpush.msra.mxu0 0.0
        %1033 = vmatpush.msra.mxu0 0.0
        %1034 = vmatpush.msra.mxu0 0.0
        %1035 = vmatpush.msra.mxu0 0.0
        %1036 = vmatpush.msra.mxu0 0.0
        %1037 = vmatpush.msra.mxu0 0.0
        %1038 = vmatpush.msra.mxu0 %v1018
        %1039 = vmatmul.f32.gmra.mxu0 %v1021
        %v1040 = vpop.f32.mrf.mxu0
        %v1041 = vadd.f32 0.0, %v1040
        %1042 = vdwg.mxu0
        %1044 = vrot.lane.b32.xlu0 %v1041, 24
        %v1045 = vpop.permute.xlu0 %1044
        %vm1047 = vcmask 261312
        %1048 = vst.msk [vmem:[#allocation5] sm:$0xff] %vm1047, %v1045
        %v1049 = vld [vmem:[#allocation5] sm:$0xff]
        %v1050 = vld [vmem:[#allocation15] sm:$0xff]
        %v1051 = vld [vmem:[#allocation15 + $0x8] sm:$0xff]
        %v1052 = vld [vmem:[#allocation15 + $0x10] sm:$0xff]
        %v1053 = vld [vmem:[#allocation15 + $0x18] sm:$0xff]
        %v1055 = vsel %vm626, %v1049, 0
        %1057 = vmatpush.msra.mxu0 0.0
        %1058 = vmatpush.msra.mxu0 0.0
        %1059 = vmatpush.msra.mxu0 0.0
        %1060 = vmatpush.msra.mxu0 0.0
        %1061 = vmatpush.msra.mxu0 0.0
        %1062 = vmatpush.msra.mxu0 0.0
        %1063 = vmatpush.msra.mxu0 0.0
        %1064 = vmatpush.msra.mxu0 0.0
        %1065 = vmatpush.msra.mxu0 0.0
        %1066 = vmatpush.msra.mxu0 0.0
        %1067 = vmatpush.msra.mxu0 0.0
        %1068 = vmatpush.msra.mxu0 0.0
        %1069 = vmatpush.msra.mxu0 %v1053
        %1070 = vmatpush.msra.mxu0 %v1052
        %1071 = vmatpush.msra.mxu0 %v1051
        %1072 = vmatpush.msra.mxu0 %v1050
        %1073 = vmatmul.f32.gmra.mxu0 %v1055
        %v1074 = vpop.f32.mrf.mxu0
        %v1075 = vadd.f32 0.0, %v1074
        %1076 = vdwg.mxu0
        %v1077 = vadd.f32 %v623, %v1075
        %v1078 = vld [vmem:[%s10] sm:$0x1]
        %v1080 = vperm.slane %v1078, 0
        %v1082 = vadd.f32 %v1077, %v1080
        %1083 = vst.msk [vmem:[%s518] sm:$0xff] %vm626, %v1082
        %s1084 = sand.u32 %s296, 1
        %s1085 = scalar_lea.sflag [#allocation8], %s1084
        %s1086 = sand.u32 %s296, 1
        %s1087 = smul.addr %s1086, 8
        %s1088 = scalar_lea.vmem [#allocation17], %s1087
        // Predicated region
        $region93: #{tpu_custom_call.1} parent=63 // pred_check
          %p1089 = pneg %p306
        $region94: #{tpu_custom_call.1} parent=63 // pred_check_branch
          %1091 = sbr.rel (%p1089) target = $region96
        $region95: #{tpu_custom_call.1} parent=63 // pred_region
          %1093 = vsyncadd %s1085, 0
          %s1094 = sadd.s32 %s38, %s37
          %s1095 = smul.addr %s1094, 8
          %s1096 = scalar_lea.hbm %s11, %s1095
          %s1098 = sshll.u32 %s1088, 4
          %s1099 = int_to_ptr.vmem [resolvable:$true] %s1098
          %s1100 = sshll.u32 %s1096, 4
          %s1101 = int_to_ptr.hbm [resolvable:$true] %s1100
          %1103 = dma.vmem_to_hbm [thread:$0]  %s1099, 128, %s1101, %s1085
        $region96: #{tpu_custom_call.1} parent=63 // pred_fallthru
          _
      $region64: #{tpu_custom_call.1} parent=5 // pred_fallthru
        _
      %p1104 = scmp.le.s32.totalorder 2, %s28
      // Predicated region
      $region97: #{tpu_custom_call.1} parent=5 // pred_check
        %p1105 = pneg %p1104
      $region98: #{tpu_custom_call.1} parent=5 // pred_check_branch
        %1107 = sbr.rel (%p1105) target = $region100
      $region99: #{tpu_custom_call.1} parent=5 // pred_region
        %s1108 = ssub.s32 %s28, 2
        // Predicated region
        $region101: #{tpu_custom_call.1} parent=99 // pred_check
          %p1109 = pneg %p312
        $region102: #{tpu_custom_call.1} parent=99 // pred_check_branch
          %1111 = sbr.rel (%p1109) target = $region104
        $region103: #{tpu_custom_call.1} parent=99 // pred_region
          %s1112 = sand.u32 %s297, 1
          %s1113 = scalar_lea.sflag [#allocation8], %s1112
          %s1114 = sand.u32 %s297, 1
          %s1115 = smul.addr %s1114, 8
          %s1116 = scalar_lea.vmem [#allocation17], %s1115
          %1118 = dma.done %s1113, 128
        $region104: #{tpu_custom_call.1} parent=99 // pred_fallthru
          _
      $region100: #{tpu_custom_call.1} parent=5 // pred_fallthru
        _
    $region6: #{tpu_custom_call.1} parent=1 // loop_footer
      %s32 = sadd.s32 1, %s28
    $region7: #{tpu_custom_call.1} parent=1 // loop_footer_branch
      %27 = sbr.rel target = $region3
    $region8: #{tpu_custom_call.1} parent=1 // loop_exit
      _
    %1119 = vsyncpa [#allocation7], 1
    %s1120 = scalar_lea.sflag [#allocation7], 1
    %1121 = vsyncpa %s1120, 1
    %1122 = vsyncpa [#allocation10], 1
    %s1123 = scalar_lea.sflag [#allocation10], 1
    %1124 = vsyncpa %s1123, 1
    %1125 = vsyncpa [#allocation13], 1
    %1126 = vsyncpa [#allocation16], 1
    %1127 = vsyncpa [#allocation8], 1
    %s1128 = scalar_lea.sflag [#allocation8], 1
    %1129 = vsyncpa %s1128, 1

</llo_original>
